<compile_context>
chip_gen: v6e
topology: v6e:2x2x1
jax: 0.10.0
libtpu: 0.0.40
codegen_flags: <defaults>
</compile_context>

<pallas_src>
import math
import jax
import jax.numpy as jnp
from jax.experimental import pallas as pl
from jax.experimental.pallas import tpu as pltpu

VMEM_SPEC = pl.BlockSpec(memory_space=pltpu.MemorySpace.VMEM)
SMEM_SPEC = pl.BlockSpec(memory_space=pltpu.MemorySpace.SMEM)

_EPS = 1e-12


def _round_up(x, m):
    return ((x + m - 1) // m) * m


# ----------------------------- Pallas kernels -------------------------------

def _text_features_kernel(p_ref, w_ref, scale_ref, o_ref):
    # Synthetic "text encoder" + normalization + logit-scale folding.
    #   prompts: (N_PAD, L, ctx_dim)  -- ctx_dim on lanes, pool over axis=1 (sublane)
    #   w:       (ctx_dim, D) bf16
    #   scale:   (1, 1) f32 SMEM, already exp(logit_scale)
    #   out:     (N_PAD, D) f32 = scale * normalize(pooled @ w)
    p = p_ref[...]                                       # f32
    pooled = jnp.mean(p, axis=1)                         # (N_PAD, ctx_dim), f32
    feat = jnp.dot(pooled.astype(jnp.bfloat16), w_ref[...],
                   preferred_element_type=jnp.float32)   # (N_PAD, D), f32 acc
    inv = jax.lax.rsqrt(jnp.sum(feat * feat, axis=-1, keepdims=True) + _EPS)
    o_ref[...] = feat * inv * scale_ref[0, 0]


def _image_logits_kernel(x_ref, w_ref, t_ref, o_ref):
    # Fused per-image hot path: image projection + L2-normalize + similarity.
    #   x:   (B_PAD, K) f32 (flattened NCHW image)
    #   w:   (K, D) bf16
    #   t:   (N_PAD, D) f32, already normalized and pre-scaled by exp(logit_scale)
    #   out: (B_PAD, N_PAD) f32 logits (lane-dense)
    feat = jnp.dot(x_ref[...].astype(jnp.bfloat16), w_ref[...],
                   preferred_element_type=jnp.float32)   # (B_PAD, D), f32 acc
    inv = jax.lax.rsqrt(jnp.sum(feat * feat, axis=-1, keepdims=True) + _EPS)
    img_n = feat * inv                                   # f32 normalization math
    o_ref[...] = jax.lax.dot_general(
        img_n.astype(jnp.bfloat16), t_ref[...].astype(jnp.bfloat16),
        (((1,), (1,)), ((), ())), preferred_element_type=jnp.float32)


# ------------------------------ wrappers -------------------------------------

def text_features_scaled(prompts_pad, w_txt_bf16, scale_exp):
    n_pad = prompts_pad.shape[0]
    d = w_txt_bf16.shape[1]
    return pl.pallas_call(
        _text_features_kernel,
        out_shape=jax.ShapeDtypeStruct((n_pad, d), jnp.float32),
        in_specs=[VMEM_SPEC, VMEM_SPEC, SMEM_SPEC],
        out_specs=VMEM_SPEC,
    )(prompts_pad, w_txt_bf16, scale_exp)


def clip_logits_fused(x_pad, w_img_bf16, txt_scaled):
    b_pad = x_pad.shape[0]
    n_pad = txt_scaled.shape[0]
    return pl.pallas_call(
        _image_logits_kernel,
        out_shape=jax.ShapeDtypeStruct((b_pad, n_pad), jnp.float32),
        in_specs=[VMEM_SPEC, VMEM_SPEC, VMEM_SPEC],
        out_specs=VMEM_SPEC,
    )(x_pad, w_img_bf16, txt_scaled)


# --------------------------- module equivalent --------------------------------

class ClipTestTimeTuningPallas:
    def __init__(self, key, n_cls=4, n_ctx=16, ctx_dim=32, suffix_len=8,
                 embed_dim=32, image_shape=(4, 16, 16)):
        k1, k2, k3, k4, k5 = jax.random.split(key, 5)
        C, H, W = image_shape
        self.n_cls, self.n_ctx, self.ctx_dim = n_cls, n_ctx, ctx_dim
        self.embed_dim = embed_dim
        self.in_dim = C * H * W
        # Lane/sublane-dense padded extents for the logits output.
        self.n_cls_pad = _round_up(max(n_cls, 1), 128)
        # PromptLearner buffers / parameter (std=0.02 init as in the module)
        self.token_prefix = 0.02 * jax.random.normal(k1, (n_cls, 1, ctx_dim), jnp.float32)
        self.token_suffix = 0.02 * jax.random.normal(k2, (n_cls, suffix_len, ctx_dim), jnp.float32)
        self.ctx = 0.02 * jax.random.normal(k3, (n_ctx, ctx_dim), jnp.float32)
        # Synthetic encoder weights (xavier-ish scale), stored bf16 for the MXU path.
        self.w_img = (jax.random.normal(k4, (self.in_dim, embed_dim), jnp.float32)
                      / math.sqrt(self.in_dim)).astype(jnp.bfloat16)
        self.w_txt = (jax.random.normal(k5, (ctx_dim, embed_dim), jnp.float32)
                      / math.sqrt(ctx_dim)).astype(jnp.bfloat16)
        # CLIP default logit_scale = log(1/0.07); exp() hoisted to host, shaped (1,1) for SMEM.
        self.logit_scale = jnp.array(math.log(1.0 / 0.07), jnp.float32)
        self.scale_exp = jnp.exp(self.logit_scale).reshape(1, 1)
        self._text_cache = None   # cached scaled+normalized text features [n_cls_pad, D]

    # ---- PromptLearner.forward (class_token_position == 'end', not learned_cls) ----
    def prompt_learner_forward(self):
        ctx = jnp.broadcast_to(self.ctx[None, :, :], (self.n_cls, self.n_ctx, self.ctx_dim))
        prompts = jnp.concatenate([self.token_prefix, ctx, self.token_suffix], axis=-2)
        return prompts                                     # (n_cls, L, ctx_dim)

    def reset(self):
        # ctx changed -> invalidate the cached text features.
        self._text_cache = None

    def get_text_features(self):
        # Hoisted out of the per-image path: recomputed only when ctx changes.
        if self._text_cache is None:
            prompts = self.prompt_learner_forward()        # (n_cls, L, ctx_dim)
            prompts_pad = jnp.pad(
                prompts, ((0, self.n_cls_pad - self.n_cls), (0, 0), (0, 0)))
            # normalization + stack([.],0).mean(0) (identity for a single set) and the
            # exp(logit_scale) multiply are folded into this single kernel.
            self._text_cache = text_features_scaled(prompts_pad, self.w_txt, self.scale_exp)
        return self._text_cache

    def inference(self, image, label=None, coeff=None):
        # TODO(synk): coeff reweighting / mean path and cross-entropy training
        # branch not implemented (inference with coeff=None, label=None only).
        B = image.shape[0]
        x_flat = image.reshape(B, -1).astype(jnp.float32)  # NCHW flattened, K = C*H*W
        b_pad = _round_up(max(B, 1), 8)
        x_pad = jnp.pad(x_flat, ((0, b_pad - B), (0, 0)))
        txt_scaled = self.get_text_features()              # cached, image-independent
        logits_pad = clip_logits_fused(x_pad, self.w_img, txt_scaled)   # (b_pad, n_cls_pad)
        return logits_pad[:B, :self.n_cls]

    def __call__(self, inp, label=None, coeff=None):
        if isinstance(inp, tuple):
            # TODO(synk): contrast_prompt_tuning not defined in the reference module.
            raise NotImplementedError
        if inp.ndim == 2:
            # TODO(synk): directional_prompt_tuning not defined in the reference module.
            raise NotImplementedError
        return self.inference(inp, label, coeff)


# ------------------------------ reference (pure JAX) ---------------------------

def _reference_logits(model, image):
    B = image.shape[0]
    x_flat = image.reshape(B, -1).astype(jnp.float32)
    img_f = x_flat @ model.w_img.astype(jnp.float32)
    img_n = img_f / jnp.sqrt(jnp.sum(img_f * img_f, axis=-1, keepdims=True) + _EPS)
    prompts = model.prompt_learner_forward()
    pooled = jnp.mean(prompts, axis=1)
    txt_f = pooled @ model.w_txt.astype(jnp.float32)
    txt_n = txt_f / jnp.sqrt(jnp.sum(txt_f * txt_f, axis=-1, keepdims=True) + _EPS)
    return jnp.exp(model.logit_scale) * img_n @ txt_n.T


if __name__ == "__main__":
    key = jax.random.PRNGKey(0)
    k_model, k_img = jax.random.split(key)
    model = ClipTestTimeTuningPallas(k_model, n_cls=4, n_ctx=16, ctx_dim=32,
                                     suffix_len=8, embed_dim=32,
                                     image_shape=(4, 16, 16))
    image = jax.random.normal(k_img, (2, 4, 16, 16), jnp.float32)   # NCHW
    logits = model(image)
    jax.block_until_ready(logits)
    assert logits.shape == (2, 4)
    assert bool(jnp.all(jnp.isfinite(logits)))
    ref = _reference_logits(model, image)
    assert bool(jnp.allclose(logits, ref, rtol=5e-2, atol=3e-1)), (logits, ref)
    print("KERNEL_OK")
</pallas_src>

<mosaic_0001>
module attributes {stable_mosaic.version = 11 : i64} {
  func.func @_text_features_kernel(%arg0: memref<128x25x32xf32, #tpu.memory_space<vmem>>, %arg1: memref<32x32xbf16, #tpu.memory_space<vmem>>, %arg2: memref<1x1xf32, #tpu.memory_space<smem>>, %arg3: memref<128x32xf32, #tpu.memory_space<vmem>>) attributes {dimension_semantics = [], scalar_prefetch = 0 : i64, scratch_operands = 0 : i64, tpu.core_type = #tpu.core_type<tc>} {
    %c0 = arith.constant 0 : index
    %c0_0 = arith.constant 0 : index
    %c0_1 = arith.constant 0 : index
    %0 = vector.load %arg0[%c0, %c0_0, %c0_1] : memref<128x25x32xf32, #tpu.memory_space<vmem>>, vector<128x25x32xf32>
    %cst = arith.constant dense<0.000000e+00> : vector<128x32xf32>
    %1 = vector.multi_reduction <add>, %0, %cst [1] : vector<128x25x32xf32> to vector<128x32xf32>
    %cst_2 = arith.constant 2.500000e+01 : f32
    %2 = vector.broadcast %cst_2 : f32 to vector<128x32xf32>
    %3 = arith.divf %1, %2 : vector<128x32xf32>
    %4 = arith.truncf %3 : vector<128x32xf32> to vector<128x32xbf16>
    %c0_3 = arith.constant 0 : index
    %c0_4 = arith.constant 0 : index
    %5 = vector.load %arg1[%c0_3, %c0_4] : memref<32x32xbf16, #tpu.memory_space<vmem>>, vector<32x32xbf16>
    %cst_5 = arith.constant dense<0.000000e+00> : vector<128x32xf32>
    %6 = tpu.matmul %4, %5, %cst_5 {dimension_numbers = #tpu.dot_dimension_numbers<[1], [0], [0], [1], [0, 0, 1, 1], [], []>} : vector<128x32xbf16>, vector<32x32xbf16>, vector<128x32xf32> -> vector<128x32xf32>
    %7 = arith.mulf %6, %6 : vector<128x32xf32>
    %cst_6 = arith.constant dense<0.000000e+00> : vector<128xf32>
    %8 = vector.multi_reduction <add>, %7, %cst_6 [1] : vector<128x32xf32> to vector<128xf32>
    %9 = vector.shape_cast %8 : vector<128xf32> to vector<128x1xf32>
    %cst_7 = arith.constant 9.99999996E-13 : f32
    %10 = vector.broadcast %cst_7 : f32 to vector<128x1xf32>
    %11 = arith.addf %9, %10 : vector<128x1xf32>
    %12 = math.rsqrt %11 : vector<128x1xf32>
    %13 = vector.broadcast %12 : vector<128x1xf32> to vector<128x32xf32>
    %14 = arith.mulf %6, %13 : vector<128x32xf32>
    %c0_8 = arith.constant 0 : index
    %c0_9 = arith.constant 0 : index
    %15 = memref.load %arg2[%c0_8, %c0_9] : memref<1x1xf32, #tpu.memory_space<smem>>
    %16 = vector.broadcast %15 : f32 to vector<128x32xf32>
    %17 = arith.mulf %14, %16 : vector<128x32xf32>
    %c0_10 = arith.constant 0 : index
    %c0_11 = arith.constant 0 : index
    %18 = vector.load %arg3[%c0_10, %c0_11] : memref<128x32xf32, #tpu.memory_space<vmem>>, vector<128x32xf32>
    tpu.vector_store %arg3[%c0_10, %c0_11], %17 {strides = array<i32>} : memref<128x32xf32, #tpu.memory_space<vmem>>, vector<128x32xf32>,
    return
  }
}

</mosaic_0001>

<llo_original>
// kernel: tpu_custom_call.1
$region0: #{tpu_custom_call.1}
  #allocation0 [shape = 'u32[]', space=smem, size = 0x4, offset = 0x4, fixed_abs, tag = 'smem constant byte address 0x4 - core index']
  #allocation1 [shape = 'u32[144,128]{1,0:T(1,128)}', space=vmem, size = 0x12000, scoped, tag = 'internal scratch']
  #allocation2 [shape = 'f32[1,1]{1,0:T(1,128)S(6)}', space=smem, size = 0x200, scoped, tag = 'scoped memory for tpu_custom_call.1']
  %s0 = inlined_call_operand.vmem [shape: f32[128,25,32], index: 0, kind: input, shape index: {}]
  %s1 = inlined_call_operand.vmem [shape: bf16[32,32], index: 1, kind: input, shape index: {}]
  %s2 = inlined_call_operand.<no memory space> [shape: f32[1,1], index: 2, kind: input, shape index: {}]
  %s3 = inlined_call_operand.vmem [shape: f32[128,32], index: 3, kind: output, shape index: {}]
  %s4 = sld [smem:[#allocation0]]
  $region22: #{tpu_custom_call.1} parent=0
    _
  %s6 = ssub.s32 1, %s4
  %s7 = scalar_select 0, %s6, %s4
  %8 = sst [smem:[#allocation2]] %s2
  // Predicated region
  $region2: #{tpu_custom_call.1} parent=0 // pred_check
    _
  $region3: #{tpu_custom_call.1} parent=0 // pred_check_branch
    %10 = sbr.rel (0) target = $region5
  $region4: #{tpu_custom_call.1} parent=0 // pred_region
    _
  $region5: #{tpu_custom_call.1} parent=0 // pred_fallthru
    _
  // Predicated region
  $region6: #{tpu_custom_call.1} parent=0 // pred_check
    _
  $region7: #{tpu_custom_call.1} parent=0 // pred_check_branch
    %12 = sbr.rel (0) target = $region9
  $region8: #{tpu_custom_call.1} parent=0 // pred_region
    _
  $region9: #{tpu_custom_call.1} parent=0 // pred_fallthru
    _
  // Predicated region
  $region10: #{tpu_custom_call.1} parent=0 // pred_check
    _
  $region11: #{tpu_custom_call.1} parent=0 // pred_check_branch
    %14 = sbr.rel (0) target = $region13
  $region12: #{tpu_custom_call.1} parent=0 // pred_region
    _
  $region13: #{tpu_custom_call.1} parent=0 // pred_fallthru
    _
  %v16 = vld [vmem:[%s0] sm:$0xff]
  %v17 = vld [vmem:[%s0 + $0x8] sm:$0xff]
  %v18 = vld [vmem:[%s0 + $0x10] sm:$0xff]
  %v19 = vld [vmem:[%s0 + $0x18] sm:$0x1]
  %v20 = vld [vmem:[%s0 + $0x20] sm:$0xff]
  %v21 = vld [vmem:[%s0 + $0x28] sm:$0xff]
  %v22 = vld [vmem:[%s0 + $0x30] sm:$0xff]
  %v23 = vld [vmem:[%s0 + $0x38] sm:$0x1]
  %v24 = vld [vmem:[%s0 + $0x40] sm:$0xff]
  %v25 = vld [vmem:[%s0 + $0x48] sm:$0xff]
  %v26 = vld [vmem:[%s0 + $0x50] sm:$0xff]
  %v27 = vld [vmem:[%s0 + $0x58] sm:$0x1]
  %v28 = vld [vmem:[%s0 + $0x60] sm:$0xff]
  %v29 = vld [vmem:[%s0 + $0x68] sm:$0xff]
  %v30 = vld [vmem:[%s0 + $0x70] sm:$0xff]
  %v31 = vld [vmem:[%s0 + $0x78] sm:$0x1]
  %v32 = vld [vmem:[%s0 + $0x80] sm:$0xff]
  %v33 = vld [vmem:[%s0 + $0x88] sm:$0xff]
  %v34 = vld [vmem:[%s0 + $0x90] sm:$0xff]
  %v35 = vld [vmem:[%s0 + $0x98] sm:$0x1]
  %v36 = vld [vmem:[%s0 + $0xa0] sm:$0xff]
  %v37 = vld [vmem:[%s0 + $0xa8] sm:$0xff]
  %v38 = vld [vmem:[%s0 + $0xb0] sm:$0xff]
  %v39 = vld [vmem:[%s0 + $0xb8] sm:$0x1]
  %v40 = vld [vmem:[%s0 + $0xc0] sm:$0xff]
  %v41 = vld [vmem:[%s0 + $0xc8] sm:$0xff]
  %v42 = vld [vmem:[%s0 + $0xd0] sm:$0xff]
  %v43 = vld [vmem:[%s0 + $0xd8] sm:$0x1]
  %v44 = vld [vmem:[%s0 + $0xe0] sm:$0xff]
  %v45 = vld [vmem:[%s0 + $0xe8] sm:$0xff]
  %v46 = vld [vmem:[%s0 + $0xf0] sm:$0xff]
  %v47 = vld [vmem:[%s0 + $0xf8] sm:$0x1]
  %v48 = vld [vmem:[%s0 + $0x100] sm:$0xff]
  %v49 = vld [vmem:[%s0 + $0x108] sm:$0xff]
  %v50 = vld [vmem:[%s0 + $0x110] sm:$0xff]
  %v51 = vld [vmem:[%s0 + $0x118] sm:$0x1]
  %v52 = vld [vmem:[%s0 + $0x120] sm:$0xff]
  %v53 = vld [vmem:[%s0 + $0x128] sm:$0xff]
  %v54 = vld [vmem:[%s0 + $0x130] sm:$0xff]
  %v55 = vld [vmem:[%s0 + $0x138] sm:$0x1]
  %v56 = vld [vmem:[%s0 + $0x140] sm:$0xff]
  %v57 = vld [vmem:[%s0 + $0x148] sm:$0xff]
  %v58 = vld [vmem:[%s0 + $0x150] sm:$0xff]
  %v59 = vld [vmem:[%s0 + $0x158] sm:$0x1]
  %v60 = vld [vmem:[%s0 + $0x160] sm:$0xff]
  %v61 = vld [vmem:[%s0 + $0x168] sm:$0xff]
  %v62 = vld [vmem:[%s0 + $0x170] sm:$0xff]
  %v63 = vld [vmem:[%s0 + $0x178] sm:$0x1]
  %v64 = vld [vmem:[%s0 + $0x180] sm:$0xff]
  %v65 = vld [vmem:[%s0 + $0x188] sm:$0xff]
  %v66 = vld [vmem:[%s0 + $0x190] sm:$0xff]
  %v67 = vld [vmem:[%s0 + $0x198] sm:$0x1]
  %v68 = vld [vmem:[%s0 + $0x1a0] sm:$0xff]
  %v69 = vld [vmem:[%s0 + $0x1a8] sm:$0xff]
  %v70 = vld [vmem:[%s0 + $0x1b0] sm:$0xff]
  %v71 = vld [vmem:[%s0 + $0x1b8] sm:$0x1]
  %v72 = vld [vmem:[%s0 + $0x1c0] sm:$0xff]
  %v73 = vld [vmem:[%s0 + $0x1c8] sm:$0xff]
  %v74 = vld [vmem:[%s0 + $0x1d0] sm:$0xff]
  %v75 = vld [vmem:[%s0 + $0x1d8] sm:$0x1]
  %v76 = vld [vmem:[%s0 + $0x1e0] sm:$0xff]
  %v77 = vld [vmem:[%s0 + $0x1e8] sm:$0xff]
  %v78 = vld [vmem:[%s0 + $0x1f0] sm:$0xff]
  %v79 = vld [vmem:[%s0 + $0x1f8] sm:$0x1]
  %v80 = vld [vmem:[%s0 + $0x200] sm:$0xff]
  %v81 = vld [vmem:[%s0 + $0x208] sm:$0xff]
  %v82 = vld [vmem:[%s0 + $0x210] sm:$0xff]
  %v83 = vld [vmem:[%s0 + $0x218] sm:$0x1]
  %v84 = vld [vmem:[%s0 + $0x220] sm:$0xff]
  %v85 = vld [vmem:[%s0 + $0x228] sm:$0xff]
  %v86 = vld [vmem:[%s0 + $0x230] sm:$0xff]
  %v87 = vld [vmem:[%s0 + $0x238] sm:$0x1]
  %v88 = vld [vmem:[%s0 + $0x240] sm:$0xff]
  %v89 = vld [vmem:[%s0 + $0x248] sm:$0xff]
  %v90 = vld [vmem:[%s0 + $0x250] sm:$0xff]
  %v91 = vld [vmem:[%s0 + $0x258] sm:$0x1]
  %v92 = vld [vmem:[%s0 + $0x260] sm:$0xff]
  %v93 = vld [vmem:[%s0 + $0x268] sm:$0xff]
  %v94 = vld [vmem:[%s0 + $0x270] sm:$0xff]
  %v95 = vld [vmem:[%s0 + $0x278] sm:$0x1]
  %v96 = vld [vmem:[%s0 + $0x280] sm:$0xff]
  %v97 = vld [vmem:[%s0 + $0x288] sm:$0xff]
  %v98 = vld [vmem:[%s0 + $0x290] sm:$0xff]
  %v99 = vld [vmem:[%s0 + $0x298] sm:$0x1]
  %v100 = vld [vmem:[%s0 + $0x2a0] sm:$0xff]
  %v101 = vld [vmem:[%s0 + $0x2a8] sm:$0xff]
  %v102 = vld [vmem:[%s0 + $0x2b0] sm:$0xff]
  %v103 = vld [vmem:[%s0 + $0x2b8] sm:$0x1]
  %v104 = vld [vmem:[%s0 + $0x2c0] sm:$0xff]
  %v105 = vld [vmem:[%s0 + $0x2c8] sm:$0xff]
  %v106 = vld [vmem:[%s0 + $0x2d0] sm:$0xff]
  %v107 = vld [vmem:[%s0 + $0x2d8] sm:$0x1]
  %v108 = vld [vmem:[%s0 + $0x2e0] sm:$0xff]
  %v109 = vld [vmem:[%s0 + $0x2e8] sm:$0xff]
  %v110 = vld [vmem:[%s0 + $0x2f0] sm:$0xff]
  %v111 = vld [vmem:[%s0 + $0x2f8] sm:$0x1]
  %v112 = vld [vmem:[%s0 + $0x300] sm:$0xff]
  %v113 = vld [vmem:[%s0 + $0x308] sm:$0xff]
  %v114 = vld [vmem:[%s0 + $0x310] sm:$0xff]
  %v115 = vld [vmem:[%s0 + $0x318] sm:$0x1]
  %v116 = vld [vmem:[%s0 + $0x320] sm:$0xff]
  %v117 = vld [vmem:[%s0 + $0x328] sm:$0xff]
  %v118 = vld [vmem:[%s0 + $0x330] sm:$0xff]
  %v119 = vld [vmem:[%s0 + $0x338] sm:$0x1]
  %v120 = vld [vmem:[%s0 + $0x340] sm:$0xff]
  %v121 = vld [vmem:[%s0 + $0x348] sm:$0xff]
  %v122 = vld [vmem:[%s0 + $0x350] sm:$0xff]
  %v123 = vld [vmem:[%s0 + $0x358] sm:$0x1]
  %v124 = vld [vmem:[%s0 + $0x360] sm:$0xff]
  %v125 = vld [vmem:[%s0 + $0x368] sm:$0xff]
  %v126 = vld [vmem:[%s0 + $0x370] sm:$0xff]
  %v127 = vld [vmem:[%s0 + $0x378] sm:$0x1]
  %v128 = vld [vmem:[%s0 + $0x380] sm:$0xff]
  %v129 = vld [vmem:[%s0 + $0x388] sm:$0xff]
  %v130 = vld [vmem:[%s0 + $0x390] sm:$0xff]
  %v131 = vld [vmem:[%s0 + $0x398] sm:$0x1]
  %v132 = vld [vmem:[%s0 + $0x3a0] sm:$0xff]
  %v133 = vld [vmem:[%s0 + $0x3a8] sm:$0xff]
  %v134 = vld [vmem:[%s0 + $0x3b0] sm:$0xff]
  %v135 = vld [vmem:[%s0 + $0x3b8] sm:$0x1]
  %v136 = vld [vmem:[%s0 + $0x3c0] sm:$0xff]
  %v137 = vld [vmem:[%s0 + $0x3c8] sm:$0xff]
  %v138 = vld [vmem:[%s0 + $0x3d0] sm:$0xff]
  %v139 = vld [vmem:[%s0 + $0x3d8] sm:$0x1]
  %v140 = vld [vmem:[%s0 + $0x3e0] sm:$0xff]
  %v141 = vld [vmem:[%s0 + $0x3e8] sm:$0xff]
  %v142 = vld [vmem:[%s0 + $0x3f0] sm:$0xff]
  %v143 = vld [vmem:[%s0 + $0x3f8] sm:$0x1]
  %v144 = vld [vmem:[%s0 + $0x400] sm:$0xff]
  %v145 = vld [vmem:[%s0 + $0x408] sm:$0xff]
  %v146 = vld [vmem:[%s0 + $0x410] sm:$0xff]
  %v147 = vld [vmem:[%s0 + $0x418] sm:$0x1]
  %v148 = vld [vmem:[%s0 + $0x420] sm:$0xff]
  %v149 = vld [vmem:[%s0 + $0x428] sm:$0xff]
  %v150 = vld [vmem:[%s0 + $0x430] sm:$0xff]
  %v151 = vld [vmem:[%s0 + $0x438] sm:$0x1]
  %v152 = vld [vmem:[%s0 + $0x440] sm:$0xff]
  %v153 = vld [vmem:[%s0 + $0x448] sm:$0xff]
  %v154 = vld [vmem:[%s0 + $0x450] sm:$0xff]
  %v155 = vld [vmem:[%s0 + $0x458] sm:$0x1]
  %v156 = vld [vmem:[%s0 + $0x460] sm:$0xff]
  %v157 = vld [vmem:[%s0 + $0x468] sm:$0xff]
  %v158 = vld [vmem:[%s0 + $0x470] sm:$0xff]
  %v159 = vld [vmem:[%s0 + $0x478] sm:$0x1]
  %v160 = vld [vmem:[%s0 + $0x480] sm:$0xff]
  %v161 = vld [vmem:[%s0 + $0x488] sm:$0xff]
  %v162 = vld [vmem:[%s0 + $0x490] sm:$0xff]
  %v163 = vld [vmem:[%s0 + $0x498] sm:$0x1]
  %v164 = vld [vmem:[%s0 + $0x4a0] sm:$0xff]
  %v165 = vld [vmem:[%s0 + $0x4a8] sm:$0xff]
  %v166 = vld [vmem:[%s0 + $0x4b0] sm:$0xff]
  %v167 = vld [vmem:[%s0 + $0x4b8] sm:$0x1]
  %v168 = vld [vmem:[%s0 + $0x4c0] sm:$0xff]
  %v169 = vld [vmem:[%s0 + $0x4c8] sm:$0xff]
  %v170 = vld [vmem:[%s0 + $0x4d0] sm:$0xff]
  %v171 = vld [vmem:[%s0 + $0x4d8] sm:$0x1]
  %v172 = vld [vmem:[%s0 + $0x4e0] sm:$0xff]
  %v173 = vld [vmem:[%s0 + $0x4e8] sm:$0xff]
  %v174 = vld [vmem:[%s0 + $0x4f0] sm:$0xff]
  %v175 = vld [vmem:[%s0 + $0x4f8] sm:$0x1]
  %v176 = vld [vmem:[%s0 + $0x500] sm:$0xff]
  %v177 = vld [vmem:[%s0 + $0x508] sm:$0xff]
  %v178 = vld [vmem:[%s0 + $0x510] sm:$0xff]
  %v179 = vld [vmem:[%s0 + $0x518] sm:$0x1]
  %v180 = vld [vmem:[%s0 + $0x520] sm:$0xff]
  %v181 = vld [vmem:[%s0 + $0x528] sm:$0xff]
  %v182 = vld [vmem:[%s0 + $0x530] sm:$0xff]
  %v183 = vld [vmem:[%s0 + $0x538] sm:$0x1]
  %v184 = vld [vmem:[%s0 + $0x540] sm:$0xff]
  %v185 = vld [vmem:[%s0 + $0x548] sm:$0xff]
  %v186 = vld [vmem:[%s0 + $0x550] sm:$0xff]
  %v187 = vld [vmem:[%s0 + $0x558] sm:$0x1]
  %v188 = vld [vmem:[%s0 + $0x560] sm:$0xff]
  %v189 = vld [vmem:[%s0 + $0x568] sm:$0xff]
  %v190 = vld [vmem:[%s0 + $0x570] sm:$0xff]
  %v191 = vld [vmem:[%s0 + $0x578] sm:$0x1]
  %v192 = vld [vmem:[%s0 + $0x580] sm:$0xff]
  %v193 = vld [vmem:[%s0 + $0x588] sm:$0xff]
  %v194 = vld [vmem:[%s0 + $0x590] sm:$0xff]
  %v195 = vld [vmem:[%s0 + $0x598] sm:$0x1]
  %v196 = vld [vmem:[%s0 + $0x5a0] sm:$0xff]
  %v197 = vld [vmem:[%s0 + $0x5a8] sm:$0xff]
  %v198 = vld [vmem:[%s0 + $0x5b0] sm:$0xff]
  %v199 = vld [vmem:[%s0 + $0x5b8] sm:$0x1]
  %v200 = vld [vmem:[%s0 + $0x5c0] sm:$0xff]
  %v201 = vld [vmem:[%s0 + $0x5c8] sm:$0xff]
  %v202 = vld [vmem:[%s0 + $0x5d0] sm:$0xff]
  %v203 = vld [vmem:[%s0 + $0x5d8] sm:$0x1]
  %v204 = vld [vmem:[%s0 + $0x5e0] sm:$0xff]
  %v205 = vld [vmem:[%s0 + $0x5e8] sm:$0xff]
  %v206 = vld [vmem:[%s0 + $0x5f0] sm:$0xff]
  %v207 = vld [vmem:[%s0 + $0x5f8] sm:$0x1]
  %v208 = vld [vmem:[%s0 + $0x600] sm:$0xff]
  %v209 = vld [vmem:[%s0 + $0x608] sm:$0xff]
  %v210 = vld [vmem:[%s0 + $0x610] sm:$0xff]
  %v211 = vld [vmem:[%s0 + $0x618] sm:$0x1]
  %v212 = vld [vmem:[%s0 + $0x620] sm:$0xff]
  %v213 = vld [vmem:[%s0 + $0x628] sm:$0xff]
  %v214 = vld [vmem:[%s0 + $0x630] sm:$0xff]
  %v215 = vld [vmem:[%s0 + $0x638] sm:$0x1]
  %v216 = vld [vmem:[%s0 + $0x640] sm:$0xff]
  %v217 = vld [vmem:[%s0 + $0x648] sm:$0xff]
  %v218 = vld [vmem:[%s0 + $0x650] sm:$0xff]
  %v219 = vld [vmem:[%s0 + $0x658] sm:$0x1]
  %v220 = vld [vmem:[%s0 + $0x660] sm:$0xff]
  %v221 = vld [vmem:[%s0 + $0x668] sm:$0xff]
  %v222 = vld [vmem:[%s0 + $0x670] sm:$0xff]
  %v223 = vld [vmem:[%s0 + $0x678] sm:$0x1]
  %v224 = vld [vmem:[%s0 + $0x680] sm:$0xff]
  %v225 = vld [vmem:[%s0 + $0x688] sm:$0xff]
  %v226 = vld [vmem:[%s0 + $0x690] sm:$0xff]
  %v227 = vld [vmem:[%s0 + $0x698] sm:$0x1]
  %v228 = vld [vmem:[%s0 + $0x6a0] sm:$0xff]
  %v229 = vld [vmem:[%s0 + $0x6a8] sm:$0xff]
  %v230 = vld [vmem:[%s0 + $0x6b0] sm:$0xff]
  %v231 = vld [vmem:[%s0 + $0x6b8] sm:$0x1]
  %v232 = vld [vmem:[%s0 + $0x6c0] sm:$0xff]
  %v233 = vld [vmem:[%s0 + $0x6c8] sm:$0xff]
  %v234 = vld [vmem:[%s0 + $0x6d0] sm:$0xff]
  %v235 = vld [vmem:[%s0 + $0x6d8] sm:$0x1]
  %v236 = vld [vmem:[%s0 + $0x6e0] sm:$0xff]
  %v237 = vld [vmem:[%s0 + $0x6e8] sm:$0xff]
  %v238 = vld [vmem:[%s0 + $0x6f0] sm:$0xff]
  %v239 = vld [vmem:[%s0 + $0x6f8] sm:$0x1]
  %v240 = vld [vmem:[%s0 + $0x700] sm:$0xff]
  %v241 = vld [vmem:[%s0 + $0x708] sm:$0xff]
  %v242 = vld [vmem:[%s0 + $0x710] sm:$0xff]
  %v243 = vld [vmem:[%s0 + $0x718] sm:$0x1]
  %v244 = vld [vmem:[%s0 + $0x720] sm:$0xff]
  %v245 = vld [vmem:[%s0 + $0x728] sm:$0xff]
  %v246 = vld [vmem:[%s0 + $0x730] sm:$0xff]
  %v247 = vld [vmem:[%s0 + $0x738] sm:$0x1]
  %v248 = vld [vmem:[%s0 + $0x740] sm:$0xff]
  %v249 = vld [vmem:[%s0 + $0x748] sm:$0xff]
  %v250 = vld [vmem:[%s0 + $0x750] sm:$0xff]
  %v251 = vld [vmem:[%s0 + $0x758] sm:$0x1]
  %v252 = vld [vmem:[%s0 + $0x760] sm:$0xff]
  %v253 = vld [vmem:[%s0 + $0x768] sm:$0xff]
  %v254 = vld [vmem:[%s0 + $0x770] sm:$0xff]
  %v255 = vld [vmem:[%s0 + $0x778] sm:$0x1]
  %v256 = vld [vmem:[%s0 + $0x780] sm:$0xff]
  %v257 = vld [vmem:[%s0 + $0x788] sm:$0xff]
  %v258 = vld [vmem:[%s0 + $0x790] sm:$0xff]
  %v259 = vld [vmem:[%s0 + $0x798] sm:$0x1]
  %v260 = vld [vmem:[%s0 + $0x7a0] sm:$0xff]
  %v261 = vld [vmem:[%s0 + $0x7a8] sm:$0xff]
  %v262 = vld [vmem:[%s0 + $0x7b0] sm:$0xff]
  %v263 = vld [vmem:[%s0 + $0x7b8] sm:$0x1]
  %v264 = vld [vmem:[%s0 + $0x7c0] sm:$0xff]
  %v265 = vld [vmem:[%s0 + $0x7c8] sm:$0xff]
  %v266 = vld [vmem:[%s0 + $0x7d0] sm:$0xff]
  %v267 = vld [vmem:[%s0 + $0x7d8] sm:$0x1]
  %v268 = vld [vmem:[%s0 + $0x7e0] sm:$0xff]
  %v269 = vld [vmem:[%s0 + $0x7e8] sm:$0xff]
  %v270 = vld [vmem:[%s0 + $0x7f0] sm:$0xff]
  %v271 = vld [vmem:[%s0 + $0x7f8] sm:$0x1]
  %v272 = vld [vmem:[%s0 + $0x800] sm:$0xff]
  %v273 = vld [vmem:[%s0 + $0x808] sm:$0xff]
  %v274 = vld [vmem:[%s0 + $0x810] sm:$0xff]
  %v275 = vld [vmem:[%s0 + $0x818] sm:$0x1]
  %v276 = vld [vmem:[%s0 + $0x820] sm:$0xff]
  %v277 = vld [vmem:[%s0 + $0x828] sm:$0xff]
  %v278 = vld [vmem:[%s0 + $0x830] sm:$0xff]
  %v279 = vld [vmem:[%s0 + $0x838] sm:$0x1]
  %v280 = vld [vmem:[%s0 + $0x840] sm:$0xff]
  %v281 = vld [vmem:[%s0 + $0x848] sm:$0xff]
  %v282 = vld [vmem:[%s0 + $0x850] sm:$0xff]
  %v283 = vld [vmem:[%s0 + $0x858] sm:$0x1]
  %v284 = vld [vmem:[%s0 + $0x860] sm:$0xff]
  %v285 = vld [vmem:[%s0 + $0x868] sm:$0xff]
  %v286 = vld [vmem:[%s0 + $0x870] sm:$0xff]
  %v287 = vld [vmem:[%s0 + $0x878] sm:$0x1]
  %v288 = vld [vmem:[%s0 + $0x880] sm:$0xff]
  %v289 = vld [vmem:[%s0 + $0x888] sm:$0xff]
  %v290 = vld [vmem:[%s0 + $0x890] sm:$0xff]
  %v291 = vld [vmem:[%s0 + $0x898] sm:$0x1]
  %v292 = vld [vmem:[%s0 + $0x8a0] sm:$0xff]
  %v293 = vld [vmem:[%s0 + $0x8a8] sm:$0xff]
  %v294 = vld [vmem:[%s0 + $0x8b0] sm:$0xff]
  %v295 = vld [vmem:[%s0 + $0x8b8] sm:$0x1]
  %v296 = vld [vmem:[%s0 + $0x8c0] sm:$0xff]
  %v297 = vld [vmem:[%s0 + $0x8c8] sm:$0xff]
  %v298 = vld [vmem:[%s0 + $0x8d0] sm:$0xff]
  %v299 = vld [vmem:[%s0 + $0x8d8] sm:$0x1]
  %v300 = vld [vmem:[%s0 + $0x8e0] sm:$0xff]
  %v301 = vld [vmem:[%s0 + $0x8e8] sm:$0xff]
  %v302 = vld [vmem:[%s0 + $0x8f0] sm:$0xff]
  %v303 = vld [vmem:[%s0 + $0x8f8] sm:$0x1]
  %v304 = vld [vmem:[%s0 + $0x900] sm:$0xff]
  %v305 = vld [vmem:[%s0 + $0x908] sm:$0xff]
  %v306 = vld [vmem:[%s0 + $0x910] sm:$0xff]
  %v307 = vld [vmem:[%s0 + $0x918] sm:$0x1]
  %v308 = vld [vmem:[%s0 + $0x920] sm:$0xff]
  %v309 = vld [vmem:[%s0 + $0x928] sm:$0xff]
  %v310 = vld [vmem:[%s0 + $0x930] sm:$0xff]
  %v311 = vld [vmem:[%s0 + $0x938] sm:$0x1]
  %v312 = vld [vmem:[%s0 + $0x940] sm:$0xff]
  %v313 = vld [vmem:[%s0 + $0x948] sm:$0xff]
  %v314 = vld [vmem:[%s0 + $0x950] sm:$0xff]
  %v315 = vld [vmem:[%s0 + $0x958] sm:$0x1]
  %v316 = vld [vmem:[%s0 + $0x960] sm:$0xff]
  %v317 = vld [vmem:[%s0 + $0x968] sm:$0xff]
  %v318 = vld [vmem:[%s0 + $0x970] sm:$0xff]
  %v319 = vld [vmem:[%s0 + $0x978] sm:$0x1]
  %v320 = vld [vmem:[%s0 + $0x980] sm:$0xff]
  %v321 = vld [vmem:[%s0 + $0x988] sm:$0xff]
  %v322 = vld [vmem:[%s0 + $0x990] sm:$0xff]
  %v323 = vld [vmem:[%s0 + $0x998] sm:$0x1]
  %v324 = vld [vmem:[%s0 + $0x9a0] sm:$0xff]
  %v325 = vld [vmem:[%s0 + $0x9a8] sm:$0xff]
  %v326 = vld [vmem:[%s0 + $0x9b0] sm:$0xff]
  %v327 = vld [vmem:[%s0 + $0x9b8] sm:$0x1]
  %v328 = vld [vmem:[%s0 + $0x9c0] sm:$0xff]
  %v329 = vld [vmem:[%s0 + $0x9c8] sm:$0xff]
  %v330 = vld [vmem:[%s0 + $0x9d0] sm:$0xff]
  %v331 = vld [vmem:[%s0 + $0x9d8] sm:$0x1]
  %v332 = vld [vmem:[%s0 + $0x9e0] sm:$0xff]
  %v333 = vld [vmem:[%s0 + $0x9e8] sm:$0xff]
  %v334 = vld [vmem:[%s0 + $0x9f0] sm:$0xff]
  %v335 = vld [vmem:[%s0 + $0x9f8] sm:$0x1]
  %v336 = vld [vmem:[%s0 + $0xa00] sm:$0xff]
  %v337 = vld [vmem:[%s0 + $0xa08] sm:$0xff]
  %v338 = vld [vmem:[%s0 + $0xa10] sm:$0xff]
  %v339 = vld [vmem:[%s0 + $0xa18] sm:$0x1]
  %v340 = vld [vmem:[%s0 + $0xa20] sm:$0xff]
  %v341 = vld [vmem:[%s0 + $0xa28] sm:$0xff]
  %v342 = vld [vmem:[%s0 + $0xa30] sm:$0xff]
  %v343 = vld [vmem:[%s0 + $0xa38] sm:$0x1]
  %v344 = vld [vmem:[%s0 + $0xa40] sm:$0xff]
  %v345 = vld [vmem:[%s0 + $0xa48] sm:$0xff]
  %v346 = vld [vmem:[%s0 + $0xa50] sm:$0xff]
  %v347 = vld [vmem:[%s0 + $0xa58] sm:$0x1]
  %v348 = vld [vmem:[%s0 + $0xa60] sm:$0xff]
  %v349 = vld [vmem:[%s0 + $0xa68] sm:$0xff]
  %v350 = vld [vmem:[%s0 + $0xa70] sm:$0xff]
  %v351 = vld [vmem:[%s0 + $0xa78] sm:$0x1]
  %v352 = vld [vmem:[%s0 + $0xa80] sm:$0xff]
  %v353 = vld [vmem:[%s0 + $0xa88] sm:$0xff]
  %v354 = vld [vmem:[%s0 + $0xa90] sm:$0xff]
  %v355 = vld [vmem:[%s0 + $0xa98] sm:$0x1]
  %v356 = vld [vmem:[%s0 + $0xaa0] sm:$0xff]
  %v357 = vld [vmem:[%s0 + $0xaa8] sm:$0xff]
  %v358 = vld [vmem:[%s0 + $0xab0] sm:$0xff]
  %v359 = vld [vmem:[%s0 + $0xab8] sm:$0x1]
  %v360 = vld [vmem:[%s0 + $0xac0] sm:$0xff]
  %v361 = vld [vmem:[%s0 + $0xac8] sm:$0xff]
  %v362 = vld [vmem:[%s0 + $0xad0] sm:$0xff]
  %v363 = vld [vmem:[%s0 + $0xad8] sm:$0x1]
  %v364 = vld [vmem:[%s0 + $0xae0] sm:$0xff]
  %v365 = vld [vmem:[%s0 + $0xae8] sm:$0xff]
  %v366 = vld [vmem:[%s0 + $0xaf0] sm:$0xff]
  %v367 = vld [vmem:[%s0 + $0xaf8] sm:$0x1]
  %v368 = vld [vmem:[%s0 + $0xb00] sm:$0xff]
  %v369 = vld [vmem:[%s0 + $0xb08] sm:$0xff]
  %v370 = vld [vmem:[%s0 + $0xb10] sm:$0xff]
  %v371 = vld [vmem:[%s0 + $0xb18] sm:$0x1]
  %v372 = vld [vmem:[%s0 + $0xb20] sm:$0xff]
  %v373 = vld [vmem:[%s0 + $0xb28] sm:$0xff]
  %v374 = vld [vmem:[%s0 + $0xb30] sm:$0xff]
  %v375 = vld [vmem:[%s0 + $0xb38] sm:$0x1]
  %v376 = vld [vmem:[%s0 + $0xb40] sm:$0xff]
  %v377 = vld [vmem:[%s0 + $0xb48] sm:$0xff]
  %v378 = vld [vmem:[%s0 + $0xb50] sm:$0xff]
  %v379 = vld [vmem:[%s0 + $0xb58] sm:$0x1]
  %v380 = vld [vmem:[%s0 + $0xb60] sm:$0xff]
  %v381 = vld [vmem:[%s0 + $0xb68] sm:$0xff]
  %v382 = vld [vmem:[%s0 + $0xb70] sm:$0xff]
  %v383 = vld [vmem:[%s0 + $0xb78] sm:$0x1]
  %v384 = vld [vmem:[%s0 + $0xb80] sm:$0xff]
  %v385 = vld [vmem:[%s0 + $0xb88] sm:$0xff]
  %v386 = vld [vmem:[%s0 + $0xb90] sm:$0xff]
  %v387 = vld [vmem:[%s0 + $0xb98] sm:$0x1]
  %v388 = vld [vmem:[%s0 + $0xba0] sm:$0xff]
  %v389 = vld [vmem:[%s0 + $0xba8] sm:$0xff]
  %v390 = vld [vmem:[%s0 + $0xbb0] sm:$0xff]
  %v391 = vld [vmem:[%s0 + $0xbb8] sm:$0x1]
  %v392 = vld [vmem:[%s0 + $0xbc0] sm:$0xff]
  %v393 = vld [vmem:[%s0 + $0xbc8] sm:$0xff]
  %v394 = vld [vmem:[%s0 + $0xbd0] sm:$0xff]
  %v395 = vld [vmem:[%s0 + $0xbd8] sm:$0x1]
  %v396 = vld [vmem:[%s0 + $0xbe0] sm:$0xff]
  %v397 = vld [vmem:[%s0 + $0xbe8] sm:$0xff]
  %v398 = vld [vmem:[%s0 + $0xbf0] sm:$0xff]
  %v399 = vld [vmem:[%s0 + $0xbf8] sm:$0x1]
  %v400 = vld [vmem:[%s0 + $0xc00] sm:$0xff]
  %v401 = vld [vmem:[%s0 + $0xc08] sm:$0xff]
  %v402 = vld [vmem:[%s0 + $0xc10] sm:$0xff]
  %v403 = vld [vmem:[%s0 + $0xc18] sm:$0x1]
  %v404 = vld [vmem:[%s0 + $0xc20] sm:$0xff]
  %v405 = vld [vmem:[%s0 + $0xc28] sm:$0xff]
  %v406 = vld [vmem:[%s0 + $0xc30] sm:$0xff]
  %v407 = vld [vmem:[%s0 + $0xc38] sm:$0x1]
  %v408 = vld [vmem:[%s0 + $0xc40] sm:$0xff]
  %v409 = vld [vmem:[%s0 + $0xc48] sm:$0xff]
  %v410 = vld [vmem:[%s0 + $0xc50] sm:$0xff]
  %v411 = vld [vmem:[%s0 + $0xc58] sm:$0x1]
  %v412 = vld [vmem:[%s0 + $0xc60] sm:$0xff]
  %v413 = vld [vmem:[%s0 + $0xc68] sm:$0xff]
  %v414 = vld [vmem:[%s0 + $0xc70] sm:$0xff]
  %v415 = vld [vmem:[%s0 + $0xc78] sm:$0x1]
  %v416 = vld [vmem:[%s0 + $0xc80] sm:$0xff]
  %v417 = vld [vmem:[%s0 + $0xc88] sm:$0xff]
  %v418 = vld [vmem:[%s0 + $0xc90] sm:$0xff]
  %v419 = vld [vmem:[%s0 + $0xc98] sm:$0x1]
  %v420 = vld [vmem:[%s0 + $0xca0] sm:$0xff]
  %v421 = vld [vmem:[%s0 + $0xca8] sm:$0xff]
  %v422 = vld [vmem:[%s0 + $0xcb0] sm:$0xff]
  %v423 = vld [vmem:[%s0 + $0xcb8] sm:$0x1]
  %v424 = vld [vmem:[%s0 + $0xcc0] sm:$0xff]
  %v425 = vld [vmem:[%s0 + $0xcc8] sm:$0xff]
  %v426 = vld [vmem:[%s0 + $0xcd0] sm:$0xff]
  %v427 = vld [vmem:[%s0 + $0xcd8] sm:$0x1]
  %v428 = vld [vmem:[%s0 + $0xce0] sm:$0xff]
  %v429 = vld [vmem:[%s0 + $0xce8] sm:$0xff]
  %v430 = vld [vmem:[%s0 + $0xcf0] sm:$0xff]
  %v431 = vld [vmem:[%s0 + $0xcf8] sm:$0x1]
  %v432 = vld [vmem:[%s0 + $0xd00] sm:$0xff]
  %v433 = vld [vmem:[%s0 + $0xd08] sm:$0xff]
  %v434 = vld [vmem:[%s0 + $0xd10] sm:$0xff]
  %v435 = vld [vmem:[%s0 + $0xd18] sm:$0x1]
  %v436 = vld [vmem:[%s0 + $0xd20] sm:$0xff]
  %v437 = vld [vmem:[%s0 + $0xd28] sm:$0xff]
  %v438 = vld [vmem:[%s0 + $0xd30] sm:$0xff]
  %v439 = vld [vmem:[%s0 + $0xd38] sm:$0x1]
  %v440 = vld [vmem:[%s0 + $0xd40] sm:$0xff]
  %v441 = vld [vmem:[%s0 + $0xd48] sm:$0xff]
  %v442 = vld [vmem:[%s0 + $0xd50] sm:$0xff]
  %v443 = vld [vmem:[%s0 + $0xd58] sm:$0x1]
  %v444 = vld [vmem:[%s0 + $0xd60] sm:$0xff]
  %v445 = vld [vmem:[%s0 + $0xd68] sm:$0xff]
  %v446 = vld [vmem:[%s0 + $0xd70] sm:$0xff]
  %v447 = vld [vmem:[%s0 + $0xd78] sm:$0x1]
  %v448 = vld [vmem:[%s0 + $0xd80] sm:$0xff]
  %v449 = vld [vmem:[%s0 + $0xd88] sm:$0xff]
  %v450 = vld [vmem:[%s0 + $0xd90] sm:$0xff]
  %v451 = vld [vmem:[%s0 + $0xd98] sm:$0x1]
  %v452 = vld [vmem:[%s0 + $0xda0] sm:$0xff]
  %v453 = vld [vmem:[%s0 + $0xda8] sm:$0xff]
  %v454 = vld [vmem:[%s0 + $0xdb0] sm:$0xff]
  %v455 = vld [vmem:[%s0 + $0xdb8] sm:$0x1]
  %v456 = vld [vmem:[%s0 + $0xdc0] sm:$0xff]
  %v457 = vld [vmem:[%s0 + $0xdc8] sm:$0xff]
  %v458 = vld [vmem:[%s0 + $0xdd0] sm:$0xff]
  %v459 = vld [vmem:[%s0 + $0xdd8] sm:$0x1]
  %v460 = vld [vmem:[%s0 + $0xde0] sm:$0xff]
  %v461 = vld [vmem:[%s0 + $0xde8] sm:$0xff]
  %v462 = vld [vmem:[%s0 + $0xdf0] sm:$0xff]
  %v463 = vld [vmem:[%s0 + $0xdf8] sm:$0x1]
  %v464 = vld [vmem:[%s0 + $0xe00] sm:$0xff]
  %v465 = vld [vmem:[%s0 + $0xe08] sm:$0xff]
  %v466 = vld [vmem:[%s0 + $0xe10] sm:$0xff]
  %v467 = vld [vmem:[%s0 + $0xe18] sm:$0x1]
  %v468 = vld [vmem:[%s0 + $0xe20] sm:$0xff]
  %v469 = vld [vmem:[%s0 + $0xe28] sm:$0xff]
  %v470 = vld [vmem:[%s0 + $0xe30] sm:$0xff]
  %v471 = vld [vmem:[%s0 + $0xe38] sm:$0x1]
  %v472 = vld [vmem:[%s0 + $0xe40] sm:$0xff]
  %v473 = vld [vmem:[%s0 + $0xe48] sm:$0xff]
  %v474 = vld [vmem:[%s0 + $0xe50] sm:$0xff]
  %v475 = vld [vmem:[%s0 + $0xe58] sm:$0x1]
  %v476 = vld [vmem:[%s0 + $0xe60] sm:$0xff]
  %v477 = vld [vmem:[%s0 + $0xe68] sm:$0xff]
  %v478 = vld [vmem:[%s0 + $0xe70] sm:$0xff]
  %v479 = vld [vmem:[%s0 + $0xe78] sm:$0x1]
  %v480 = vld [vmem:[%s0 + $0xe80] sm:$0xff]
  %v481 = vld [vmem:[%s0 + $0xe88] sm:$0xff]
  %v482 = vld [vmem:[%s0 + $0xe90] sm:$0xff]
  %v483 = vld [vmem:[%s0 + $0xe98] sm:$0x1]
  %v484 = vld [vmem:[%s0 + $0xea0] sm:$0xff]
  %v485 = vld [vmem:[%s0 + $0xea8] sm:$0xff]
  %v486 = vld [vmem:[%s0 + $0xeb0] sm:$0xff]
  %v487 = vld [vmem:[%s0 + $0xeb8] sm:$0x1]
  %v488 = vld [vmem:[%s0 + $0xec0] sm:$0xff]
  %v489 = vld [vmem:[%s0 + $0xec8] sm:$0xff]
  %v490 = vld [vmem:[%s0 + $0xed0] sm:$0xff]
  %v491 = vld [vmem:[%s0 + $0xed8] sm:$0x1]
  %v492 = vld [vmem:[%s0 + $0xee0] sm:$0xff]
  %v493 = vld [vmem:[%s0 + $0xee8] sm:$0xff]
  %v494 = vld [vmem:[%s0 + $0xef0] sm:$0xff]
  %v495 = vld [vmem:[%s0 + $0xef8] sm:$0x1]
  %v496 = vld [vmem:[%s0 + $0xf00] sm:$0xff]
  %v497 = vld [vmem:[%s0 + $0xf08] sm:$0xff]
  %v498 = vld [vmem:[%s0 + $0xf10] sm:$0xff]
  %v499 = vld [vmem:[%s0 + $0xf18] sm:$0x1]
  %v500 = vld [vmem:[%s0 + $0xf20] sm:$0xff]
  %v501 = vld [vmem:[%s0 + $0xf28] sm:$0xff]
  %v502 = vld [vmem:[%s0 + $0xf30] sm:$0xff]
  %v503 = vld [vmem:[%s0 + $0xf38] sm:$0x1]
  %v504 = vld [vmem:[%s0 + $0xf40] sm:$0xff]
  %v505 = vld [vmem:[%s0 + $0xf48] sm:$0xff]
  %v506 = vld [vmem:[%s0 + $0xf50] sm:$0xff]
  %v507 = vld [vmem:[%s0 + $0xf58] sm:$0x1]
  %v508 = vld [vmem:[%s0 + $0xf60] sm:$0xff]
  %v509 = vld [vmem:[%s0 + $0xf68] sm:$0xff]
  %v510 = vld [vmem:[%s0 + $0xf70] sm:$0xff]
  %v511 = vld [vmem:[%s0 + $0xf78] sm:$0x1]
  %v512 = vld [vmem:[%s0 + $0xf80] sm:$0xff]
  %v513 = vld [vmem:[%s0 + $0xf88] sm:$0xff]
  %v514 = vld [vmem:[%s0 + $0xf90] sm:$0xff]
  %v515 = vld [vmem:[%s0 + $0xf98] sm:$0x1]
  %v516 = vld [vmem:[%s0 + $0xfa0] sm:$0xff]
  %v517 = vld [vmem:[%s0 + $0xfa8] sm:$0xff]
  %v518 = vld [vmem:[%s0 + $0xfb0] sm:$0xff]
  %v519 = vld [vmem:[%s0 + $0xfb8] sm:$0x1]
  %v520 = vld [vmem:[%s0 + $0xfc0] sm:$0xff]
  %v521 = vld [vmem:[%s0 + $0xfc8] sm:$0xff]
  %v522 = vld [vmem:[%s0 + $0xfd0] sm:$0xff]
  %v523 = vld [vmem:[%s0 + $0xfd8] sm:$0x1]
  %v524 = vld [vmem:[%s0 + $0xfe0] sm:$0xff]
  %v525 = vld [vmem:[%s0 + $0xfe8] sm:$0xff]
  %v526 = vld [vmem:[%s0 + $0xff0] sm:$0xff]
  %v527 = vld [vmem:[%s0 + $0xff8] sm:$0x1]
  %vm528 = vcmask 261120
  %v529 = vsel %vm528, %v16, 0.0
  %v530 = vsel %vm528, %v17, 0.0
  %v531 = vadd.f32 %v529, %v530
  %v532 = vsel %vm528, %v18, 0.0
  %v533 = vadd.f32 %v531, %v532
  %vm534 = vcmask 253952
  %v535 = vsel %vm534, %v19, 0.0
  %v536 = vadd.f32 %v533, %v535
  %v537 = vrot.slane %v536, 4
  %v538 = vadd.f32 %v536, %v537
  %v539 = vrot.slane %v538, 2
  %v540 = vadd.f32 %v538, %v539
  %v541 = vrot.slane %v540, 1
  %v542 = vadd.f32 %v540, %v541
  %v543 = vsel %vm528, %v20, 0.0
  %v544 = vsel %vm528, %v21, 0.0
  %v545 = vadd.f32 %v543, %v544
  %v546 = vsel %vm528, %v22, 0.0
  %v547 = vadd.f32 %v545, %v546
  %v548 = vsel %vm534, %v23, 0.0
  %v549 = vadd.f32 %v547, %v548
  %v550 = vrot.slane %v549, 4
  %v551 = vadd.f32 %v549, %v550
  %v552 = vrot.slane %v551, 2
  %v553 = vadd.f32 %v551, %v552
  %v554 = vrot.slane %v553, 1
  %v555 = vadd.f32 %v553, %v554
  %v556 = vsel %vm528, %v24, 0.0
  %v557 = vsel %vm528, %v25, 0.0
  %v558 = vadd.f32 %v556, %v557
  %v559 = vsel %vm528, %v26, 0.0
  %v560 = vadd.f32 %v558, %v559
  %v561 = vsel %vm534, %v27, 0.0
  %v562 = vadd.f32 %v560, %v561
  %v563 = vrot.slane %v562, 4
  %v564 = vadd.f32 %v562, %v563
  %v565 = vrot.slane %v564, 2
  %v566 = vadd.f32 %v564, %v565
  %v567 = vrot.slane %v566, 1
  %v568 = vadd.f32 %v566, %v567
  %v569 = vsel %vm528, %v28, 0.0
  %v570 = vsel %vm528, %v29, 0.0
  %v571 = vadd.f32 %v569, %v570
  %v572 = vsel %vm528, %v30, 0.0
  %v573 = vadd.f32 %v571, %v572
  %v574 = vsel %vm534, %v31, 0.0
  %v575 = vadd.f32 %v573, %v574
  %v576 = vrot.slane %v575, 4
  %v577 = vadd.f32 %v575, %v576
  %v578 = vrot.slane %v577, 2
  %v579 = vadd.f32 %v577, %v578
  %v580 = vrot.slane %v579, 1
  %v581 = vadd.f32 %v579, %v580
  %v582 = vsel %vm528, %v32, 0.0
  %v583 = vsel %vm528, %v33, 0.0
  %v584 = vadd.f32 %v582, %v583
  %v585 = vsel %vm528, %v34, 0.0
  %v586 = vadd.f32 %v584, %v585
  %v587 = vsel %vm534, %v35, 0.0
  %v588 = vadd.f32 %v586, %v587
  %v589 = vrot.slane %v588, 4
  %v590 = vadd.f32 %v588, %v589
  %v591 = vrot.slane %v590, 2
  %v592 = vadd.f32 %v590, %v591
  %v593 = vrot.slane %v592, 1
  %v594 = vadd.f32 %v592, %v593
  %v595 = vsel %vm528, %v36, 0.0
  %v596 = vsel %vm528, %v37, 0.0
  %v597 = vadd.f32 %v595, %v596
  %v598 = vsel %vm528, %v38, 0.0
  %v599 = vadd.f32 %v597, %v598
  %v600 = vsel %vm534, %v39, 0.0
  %v601 = vadd.f32 %v599, %v600
  %v602 = vrot.slane %v601, 4
  %v603 = vadd.f32 %v601, %v602
  %v604 = vrot.slane %v603, 2
  %v605 = vadd.f32 %v603, %v604
  %v606 = vrot.slane %v605, 1
  %v607 = vadd.f32 %v605, %v606
  %v608 = vsel %vm528, %v40, 0.0
  %v609 = vsel %vm528, %v41, 0.0
  %v610 = vadd.f32 %v608, %v609
  %v611 = vsel %vm528, %v42, 0.0
  %v612 = vadd.f32 %v610, %v611
  %v613 = vsel %vm534, %v43, 0.0
  %v614 = vadd.f32 %v612, %v613
  %v615 = vrot.slane %v614, 4
  %v616 = vadd.f32 %v614, %v615
  %v617 = vrot.slane %v616, 2
  %v618 = vadd.f32 %v616, %v617
  %v619 = vrot.slane %v618, 1
  %v620 = vadd.f32 %v618, %v619
  %v621 = vsel %vm528, %v44, 0.0
  %v622 = vsel %vm528, %v45, 0.0
  %v623 = vadd.f32 %v621, %v622
  %v624 = vsel %vm528, %v46, 0.0
  %v625 = vadd.f32 %v623, %v624
  %v626 = vsel %vm534, %v47, 0.0
  %v627 = vadd.f32 %v625, %v626
  %v628 = vrot.slane %v627, 4
  %v629 = vadd.f32 %v627, %v628
  %v630 = vrot.slane %v629, 2
  %v631 = vadd.f32 %v629, %v630
  %v632 = vrot.slane %v631, 1
  %v633 = vadd.f32 %v631, %v632
  %v634 = vsel %vm528, %v48, 0.0
  %v635 = vsel %vm528, %v49, 0.0
  %v636 = vadd.f32 %v634, %v635
  %v637 = vsel %vm528, %v50, 0.0
  %v638 = vadd.f32 %v636, %v637
  %v639 = vsel %vm534, %v51, 0.0
  %v640 = vadd.f32 %v638, %v639
  %v641 = vrot.slane %v640, 4
  %v642 = vadd.f32 %v640, %v641
  %v643 = vrot.slane %v642, 2
  %v644 = vadd.f32 %v642, %v643
  %v645 = vrot.slane %v644, 1
  %v646 = vadd.f32 %v644, %v645
  %v647 = vsel %vm528, %v52, 0.0
  %v648 = vsel %vm528, %v53, 0.0
  %v649 = vadd.f32 %v647, %v648
  %v650 = vsel %vm528, %v54, 0.0
  %v651 = vadd.f32 %v649, %v650
  %v652 = vsel %vm534, %v55, 0.0
  %v653 = vadd.f32 %v651, %v652
  %v654 = vrot.slane %v653, 4
  %v655 = vadd.f32 %v653, %v654
  %v656 = vrot.slane %v655, 2
  %v657 = vadd.f32 %v655, %v656
  %v658 = vrot.slane %v657, 1
  %v659 = vadd.f32 %v657, %v658
  %v660 = vsel %vm528, %v56, 0.0
  %v661 = vsel %vm528, %v57, 0.0
  %v662 = vadd.f32 %v660, %v661
  %v663 = vsel %vm528, %v58, 0.0
  %v664 = vadd.f32 %v662, %v663
  %v665 = vsel %vm534, %v59, 0.0
  %v666 = vadd.f32 %v664, %v665
  %v667 = vrot.slane %v666, 4
  %v668 = vadd.f32 %v666, %v667
  %v669 = vrot.slane %v668, 2
  %v670 = vadd.f32 %v668, %v669
  %v671 = vrot.slane %v670, 1
  %v672 = vadd.f32 %v670, %v671
  %v673 = vsel %vm528, %v60, 0.0
  %v674 = vsel %vm528, %v61, 0.0
  %v675 = vadd.f32 %v673, %v674
  %v676 = vsel %vm528, %v62, 0.0
  %v677 = vadd.f32 %v675, %v676
  %v678 = vsel %vm534, %v63, 0.0
  %v679 = vadd.f32 %v677, %v678
  %v680 = vrot.slane %v679, 4
  %v681 = vadd.f32 %v679, %v680
  %v682 = vrot.slane %v681, 2
  %v683 = vadd.f32 %v681, %v682
  %v684 = vrot.slane %v683, 1
  %v685 = vadd.f32 %v683, %v684
  %v686 = vsel %vm528, %v64, 0.0
  %v687 = vsel %vm528, %v65, 0.0
  %v688 = vadd.f32 %v686, %v687
  %v689 = vsel %vm528, %v66, 0.0
  %v690 = vadd.f32 %v688, %v689
  %v691 = vsel %vm534, %v67, 0.0
  %v692 = vadd.f32 %v690, %v691
  %v693 = vrot.slane %v692, 4
  %v694 = vadd.f32 %v692, %v693
  %v695 = vrot.slane %v694, 2
  %v696 = vadd.f32 %v694, %v695
  %v697 = vrot.slane %v696, 1
  %v698 = vadd.f32 %v696, %v697
  %v699 = vsel %vm528, %v68, 0.0
  %v700 = vsel %vm528, %v69, 0.0
  %v701 = vadd.f32 %v699, %v700
  %v702 = vsel %vm528, %v70, 0.0
  %v703 = vadd.f32 %v701, %v702
  %v704 = vsel %vm534, %v71, 0.0
  %v705 = vadd.f32 %v703, %v704
  %v706 = vrot.slane %v705, 4
  %v707 = vadd.f32 %v705, %v706
  %v708 = vrot.slane %v707, 2
  %v709 = vadd.f32 %v707, %v708
  %v710 = vrot.slane %v709, 1
  %v711 = vadd.f32 %v709, %v710
  %v712 = vsel %vm528, %v72, 0.0
  %v713 = vsel %vm528, %v73, 0.0
  %v714 = vadd.f32 %v712, %v713
  %v715 = vsel %vm528, %v74, 0.0
  %v716 = vadd.f32 %v714, %v715
  %v717 = vsel %vm534, %v75, 0.0
  %v718 = vadd.f32 %v716, %v717
  %v719 = vrot.slane %v718, 4
  %v720 = vadd.f32 %v718, %v719
  %v721 = vrot.slane %v720, 2
  %v722 = vadd.f32 %v720, %v721
  %v723 = vrot.slane %v722, 1
  %v724 = vadd.f32 %v722, %v723
  %v725 = vsel %vm528, %v76, 0.0
  %v726 = vsel %vm528, %v77, 0.0
  %v727 = vadd.f32 %v725, %v726
  %v728 = vsel %vm528, %v78, 0.0
  %v729 = vadd.f32 %v727, %v728
  %v730 = vsel %vm534, %v79, 0.0
  %v731 = vadd.f32 %v729, %v730
  %v732 = vrot.slane %v731, 4
  %v733 = vadd.f32 %v731, %v732
  %v734 = vrot.slane %v733, 2
  %v735 = vadd.f32 %v733, %v734
  %v736 = vrot.slane %v735, 1
  %v737 = vadd.f32 %v735, %v736
  %v738 = vsel %vm528, %v80, 0.0
  %v739 = vsel %vm528, %v81, 0.0
  %v740 = vadd.f32 %v738, %v739
  %v741 = vsel %vm528, %v82, 0.0
  %v742 = vadd.f32 %v740, %v741
  %v743 = vsel %vm534, %v83, 0.0
  %v744 = vadd.f32 %v742, %v743
  %v745 = vrot.slane %v744, 4
  %v746 = vadd.f32 %v744, %v745
  %v747 = vrot.slane %v746, 2
  %v748 = vadd.f32 %v746, %v747
  %v749 = vrot.slane %v748, 1
  %v750 = vadd.f32 %v748, %v749
  %v751 = vsel %vm528, %v84, 0.0
  %v752 = vsel %vm528, %v85, 0.0
  %v753 = vadd.f32 %v751, %v752
  %v754 = vsel %vm528, %v86, 0.0
  %v755 = vadd.f32 %v753, %v754
  %v756 = vsel %vm534, %v87, 0.0
  %v757 = vadd.f32 %v755, %v756
  %v758 = vrot.slane %v757, 4
  %v759 = vadd.f32 %v757, %v758
  %v760 = vrot.slane %v759, 2
  %v761 = vadd.f32 %v759, %v760
  %v762 = vrot.slane %v761, 1
  %v763 = vadd.f32 %v761, %v762
  %v764 = vsel %vm528, %v88, 0.0
  %v765 = vsel %vm528, %v89, 0.0
  %v766 = vadd.f32 %v764, %v765
  %v767 = vsel %vm528, %v90, 0.0
  %v768 = vadd.f32 %v766, %v767
  %v769 = vsel %vm534, %v91, 0.0
  %v770 = vadd.f32 %v768, %v769
  %v771 = vrot.slane %v770, 4
  %v772 = vadd.f32 %v770, %v771
  %v773 = vrot.slane %v772, 2
  %v774 = vadd.f32 %v772, %v773
  %v775 = vrot.slane %v774, 1
  %v776 = vadd.f32 %v774, %v775
  %v777 = vsel %vm528, %v92, 0.0
  %v778 = vsel %vm528, %v93, 0.0
  %v779 = vadd.f32 %v777, %v778
  %v780 = vsel %vm528, %v94, 0.0
  %v781 = vadd.f32 %v779, %v780
  %v782 = vsel %vm534, %v95, 0.0
  %v783 = vadd.f32 %v781, %v782
  %v784 = vrot.slane %v783, 4
  %v785 = vadd.f32 %v783, %v784
  %v786 = vrot.slane %v785, 2
  %v787 = vadd.f32 %v785, %v786
  %v788 = vrot.slane %v787, 1
  %v789 = vadd.f32 %v787, %v788
  %v790 = vsel %vm528, %v96, 0.0
  %v791 = vsel %vm528, %v97, 0.0
  %v792 = vadd.f32 %v790, %v791
  %v793 = vsel %vm528, %v98, 0.0
  %v794 = vadd.f32 %v792, %v793
  %v795 = vsel %vm534, %v99, 0.0
  %v796 = vadd.f32 %v794, %v795
  %v797 = vrot.slane %v796, 4
  %v798 = vadd.f32 %v796, %v797
  %v799 = vrot.slane %v798, 2
  %v800 = vadd.f32 %v798, %v799
  %v801 = vrot.slane %v800, 1
  %v802 = vadd.f32 %v800, %v801
  %v803 = vsel %vm528, %v100, 0.0
  %v804 = vsel %vm528, %v101, 0.0
  %v805 = vadd.f32 %v803, %v804
  %v806 = vsel %vm528, %v102, 0.0
  %v807 = vadd.f32 %v805, %v806
  %v808 = vsel %vm534, %v103, 0.0
  %v809 = vadd.f32 %v807, %v808
  %v810 = vrot.slane %v809, 4
  %v811 = vadd.f32 %v809, %v810
  %v812 = vrot.slane %v811, 2
  %v813 = vadd.f32 %v811, %v812
  %v814 = vrot.slane %v813, 1
  %v815 = vadd.f32 %v813, %v814
  %v816 = vsel %vm528, %v104, 0.0
  %v817 = vsel %vm528, %v105, 0.0
  %v818 = vadd.f32 %v816, %v817
  %v819 = vsel %vm528, %v106, 0.0
  %v820 = vadd.f32 %v818, %v819
  %v821 = vsel %vm534, %v107, 0.0
  %v822 = vadd.f32 %v820, %v821
  %v823 = vrot.slane %v822, 4
  %v824 = vadd.f32 %v822, %v823
  %v825 = vrot.slane %v824, 2
  %v826 = vadd.f32 %v824, %v825
  %v827 = vrot.slane %v826, 1
  %v828 = vadd.f32 %v826, %v827
  %v829 = vsel %vm528, %v108, 0.0
  %v830 = vsel %vm528, %v109, 0.0
  %v831 = vadd.f32 %v829, %v830
  %v832 = vsel %vm528, %v110, 0.0
  %v833 = vadd.f32 %v831, %v832
  %v834 = vsel %vm534, %v111, 0.0
  %v835 = vadd.f32 %v833, %v834
  %v836 = vrot.slane %v835, 4
  %v837 = vadd.f32 %v835, %v836
  %v838 = vrot.slane %v837, 2
  %v839 = vadd.f32 %v837, %v838
  %v840 = vrot.slane %v839, 1
  %v841 = vadd.f32 %v839, %v840
  %v842 = vsel %vm528, %v112, 0.0
  %v843 = vsel %vm528, %v113, 0.0
  %v844 = vadd.f32 %v842, %v843
  %v845 = vsel %vm528, %v114, 0.0
  %v846 = vadd.f32 %v844, %v845
  %v847 = vsel %vm534, %v115, 0.0
  %v848 = vadd.f32 %v846, %v847
  %v849 = vrot.slane %v848, 4
  %v850 = vadd.f32 %v848, %v849
  %v851 = vrot.slane %v850, 2
  %v852 = vadd.f32 %v850, %v851
  %v853 = vrot.slane %v852, 1
  %v854 = vadd.f32 %v852, %v853
  %v855 = vsel %vm528, %v116, 0.0
  %v856 = vsel %vm528, %v117, 0.0
  %v857 = vadd.f32 %v855, %v856
  %v858 = vsel %vm528, %v118, 0.0
  %v859 = vadd.f32 %v857, %v858
  %v860 = vsel %vm534, %v119, 0.0
  %v861 = vadd.f32 %v859, %v860
  %v862 = vrot.slane %v861, 4
  %v863 = vadd.f32 %v861, %v862
  %v864 = vrot.slane %v863, 2
  %v865 = vadd.f32 %v863, %v864
  %v866 = vrot.slane %v865, 1
  %v867 = vadd.f32 %v865, %v866
  %v868 = vsel %vm528, %v120, 0.0
  %v869 = vsel %vm528, %v121, 0.0
  %v870 = vadd.f32 %v868, %v869
  %v871 = vsel %vm528, %v122, 0.0
  %v872 = vadd.f32 %v870, %v871
  %v873 = vsel %vm534, %v123, 0.0
  %v874 = vadd.f32 %v872, %v873
  %v875 = vrot.slane %v874, 4
  %v876 = vadd.f32 %v874, %v875
  %v877 = vrot.slane %v876, 2
  %v878 = vadd.f32 %v876, %v877
  %v879 = vrot.slane %v878, 1
  %v880 = vadd.f32 %v878, %v879
  %v881 = vsel %vm528, %v124, 0.0
  %v882 = vsel %vm528, %v125, 0.0
  %v883 = vadd.f32 %v881, %v882
  %v884 = vsel %vm528, %v126, 0.0
  %v885 = vadd.f32 %v883, %v884
  %v886 = vsel %vm534, %v127, 0.0
  %v887 = vadd.f32 %v885, %v886
  %v888 = vrot.slane %v887, 4
  %v889 = vadd.f32 %v887, %v888
  %v890 = vrot.slane %v889, 2
  %v891 = vadd.f32 %v889, %v890
  %v892 = vrot.slane %v891, 1
  %v893 = vadd.f32 %v891, %v892
  %v894 = vsel %vm528, %v128, 0.0
  %v895 = vsel %vm528, %v129, 0.0
  %v896 = vadd.f32 %v894, %v895
  %v897 = vsel %vm528, %v130, 0.0
  %v898 = vadd.f32 %v896, %v897
  %v899 = vsel %vm534, %v131, 0.0
  %v900 = vadd.f32 %v898, %v899
  %v901 = vrot.slane %v900, 4
  %v902 = vadd.f32 %v900, %v901
  %v903 = vrot.slane %v902, 2
  %v904 = vadd.f32 %v902, %v903
  %v905 = vrot.slane %v904, 1
  %v906 = vadd.f32 %v904, %v905
  %v907 = vsel %vm528, %v132, 0.0
  %v908 = vsel %vm528, %v133, 0.0
  %v909 = vadd.f32 %v907, %v908
  %v910 = vsel %vm528, %v134, 0.0
  %v911 = vadd.f32 %v909, %v910
  %v912 = vsel %vm534, %v135, 0.0
  %v913 = vadd.f32 %v911, %v912
  %v914 = vrot.slane %v913, 4
  %v915 = vadd.f32 %v913, %v914
  %v916 = vrot.slane %v915, 2
  %v917 = vadd.f32 %v915, %v916
  %v918 = vrot.slane %v917, 1
  %v919 = vadd.f32 %v917, %v918
  %v920 = vsel %vm528, %v136, 0.0
  %v921 = vsel %vm528, %v137, 0.0
  %v922 = vadd.f32 %v920, %v921
  %v923 = vsel %vm528, %v138, 0.0
  %v924 = vadd.f32 %v922, %v923
  %v925 = vsel %vm534, %v139, 0.0
  %v926 = vadd.f32 %v924, %v925
  %v927 = vrot.slane %v926, 4
  %v928 = vadd.f32 %v926, %v927
  %v929 = vrot.slane %v928, 2
  %v930 = vadd.f32 %v928, %v929
  %v931 = vrot.slane %v930, 1
  %v932 = vadd.f32 %v930, %v931
  %v933 = vsel %vm528, %v140, 0.0
  %v934 = vsel %vm528, %v141, 0.0
  %v935 = vadd.f32 %v933, %v934
  %v936 = vsel %vm528, %v142, 0.0
  %v937 = vadd.f32 %v935, %v936
  %v938 = vsel %vm534, %v143, 0.0
  %v939 = vadd.f32 %v937, %v938
  %v940 = vrot.slane %v939, 4
  %v941 = vadd.f32 %v939, %v940
  %v942 = vrot.slane %v941, 2
  %v943 = vadd.f32 %v941, %v942
  %v944 = vrot.slane %v943, 1
  %v945 = vadd.f32 %v943, %v944
  %v946 = vsel %vm528, %v144, 0.0
  %v947 = vsel %vm528, %v145, 0.0
  %v948 = vadd.f32 %v946, %v947
  %v949 = vsel %vm528, %v146, 0.0
  %v950 = vadd.f32 %v948, %v949
  %v951 = vsel %vm534, %v147, 0.0
  %v952 = vadd.f32 %v950, %v951
  %v953 = vrot.slane %v952, 4
  %v954 = vadd.f32 %v952, %v953
  %v955 = vrot.slane %v954, 2
  %v956 = vadd.f32 %v954, %v955
  %v957 = vrot.slane %v956, 1
  %v958 = vadd.f32 %v956, %v957
  %v959 = vsel %vm528, %v148, 0.0
  %v960 = vsel %vm528, %v149, 0.0
  %v961 = vadd.f32 %v959, %v960
  %v962 = vsel %vm528, %v150, 0.0
  %v963 = vadd.f32 %v961, %v962
  %v964 = vsel %vm534, %v151, 0.0
  %v965 = vadd.f32 %v963, %v964
  %v966 = vrot.slane %v965, 4
  %v967 = vadd.f32 %v965, %v966
  %v968 = vrot.slane %v967, 2
  %v969 = vadd.f32 %v967, %v968
  %v970 = vrot.slane %v969, 1
  %v971 = vadd.f32 %v969, %v970
  %v972 = vsel %vm528, %v152, 0.0
  %v973 = vsel %vm528, %v153, 0.0
  %v974 = vadd.f32 %v972, %v973
  %v975 = vsel %vm528, %v154, 0.0
  %v976 = vadd.f32 %v974, %v975
  %v977 = vsel %vm534, %v155, 0.0
  %v978 = vadd.f32 %v976, %v977
  %v979 = vrot.slane %v978, 4
  %v980 = vadd.f32 %v978, %v979
  %v981 = vrot.slane %v980, 2
  %v982 = vadd.f32 %v980, %v981
  %v983 = vrot.slane %v982, 1
  %v984 = vadd.f32 %v982, %v983
  %v985 = vsel %vm528, %v156, 0.0
  %v986 = vsel %vm528, %v157, 0.0
  %v987 = vadd.f32 %v985, %v986
  %v988 = vsel %vm528, %v158, 0.0
  %v989 = vadd.f32 %v987, %v988
  %v990 = vsel %vm534, %v159, 0.0
  %v991 = vadd.f32 %v989, %v990
  %v992 = vrot.slane %v991, 4
  %v993 = vadd.f32 %v991, %v992
  %v994 = vrot.slane %v993, 2
  %v995 = vadd.f32 %v993, %v994
  %v996 = vrot.slane %v995, 1
  %v997 = vadd.f32 %v995, %v996
  %v998 = vsel %vm528, %v160, 0.0
  %v999 = vsel %vm528, %v161, 0.0
  %v1000 = vadd.f32 %v998, %v999
  %v1001 = vsel %vm528, %v162, 0.0
  %v1002 = vadd.f32 %v1000, %v1001
  %v1003 = vsel %vm534, %v163, 0.0
  %v1004 = vadd.f32 %v1002, %v1003
  %v1005 = vrot.slane %v1004, 4
  %v1006 = vadd.f32 %v1004, %v1005
  %v1007 = vrot.slane %v1006, 2
  %v1008 = vadd.f32 %v1006, %v1007
  %v1009 = vrot.slane %v1008, 1
  %v1010 = vadd.f32 %v1008, %v1009
  %v1011 = vsel %vm528, %v164, 0.0
  %v1012 = vsel %vm528, %v165, 0.0
  %v1013 = vadd.f32 %v1011, %v1012
  %v1014 = vsel %vm528, %v166, 0.0
  %v1015 = vadd.f32 %v1013, %v1014
  %v1016 = vsel %vm534, %v167, 0.0
  %v1017 = vadd.f32 %v1015, %v1016
  %v1018 = vrot.slane %v1017, 4
  %v1019 = vadd.f32 %v1017, %v1018
  %v1020 = vrot.slane %v1019, 2
  %v1021 = vadd.f32 %v1019, %v1020
  %v1022 = vrot.slane %v1021, 1
  %v1023 = vadd.f32 %v1021, %v1022
  %v1024 = vsel %vm528, %v168, 0.0
  %v1025 = vsel %vm528, %v169, 0.0
  %v1026 = vadd.f32 %v1024, %v1025
  %v1027 = vsel %vm528, %v170, 0.0
  %v1028 = vadd.f32 %v1026, %v1027
  %v1029 = vsel %vm534, %v171, 0.0
  %v1030 = vadd.f32 %v1028, %v1029
  %v1031 = vrot.slane %v1030, 4
  %v1032 = vadd.f32 %v1030, %v1031
  %v1033 = vrot.slane %v1032, 2
  %v1034 = vadd.f32 %v1032, %v1033
  %v1035 = vrot.slane %v1034, 1
  %v1036 = vadd.f32 %v1034, %v1035
  %v1037 = vsel %vm528, %v172, 0.0
  %v1038 = vsel %vm528, %v173, 0.0
  %v1039 = vadd.f32 %v1037, %v1038
  %v1040 = vsel %vm528, %v174, 0.0
  %v1041 = vadd.f32 %v1039, %v1040
  %v1042 = vsel %vm534, %v175, 0.0
  %v1043 = vadd.f32 %v1041, %v1042
  %v1044 = vrot.slane %v1043, 4
  %v1045 = vadd.f32 %v1043, %v1044
  %v1046 = vrot.slane %v1045, 2
  %v1047 = vadd.f32 %v1045, %v1046
  %v1048 = vrot.slane %v1047, 1
  %v1049 = vadd.f32 %v1047, %v1048
  %v1050 = vsel %vm528, %v176, 0.0
  %v1051 = vsel %vm528, %v177, 0.0
  %v1052 = vadd.f32 %v1050, %v1051
  %v1053 = vsel %vm528, %v178, 0.0
  %v1054 = vadd.f32 %v1052, %v1053
  %v1055 = vsel %vm534, %v179, 0.0
  %v1056 = vadd.f32 %v1054, %v1055
  %v1057 = vrot.slane %v1056, 4
  %v1058 = vadd.f32 %v1056, %v1057
  %v1059 = vrot.slane %v1058, 2
  %v1060 = vadd.f32 %v1058, %v1059
  %v1061 = vrot.slane %v1060, 1
  %v1062 = vadd.f32 %v1060, %v1061
  %v1063 = vsel %vm528, %v180, 0.0
  %v1064 = vsel %vm528, %v181, 0.0
  %v1065 = vadd.f32 %v1063, %v1064
  %v1066 = vsel %vm528, %v182, 0.0
  %v1067 = vadd.f32 %v1065, %v1066
  %v1068 = vsel %vm534, %v183, 0.0
  %v1069 = vadd.f32 %v1067, %v1068
  %v1070 = vrot.slane %v1069, 4
  %v1071 = vadd.f32 %v1069, %v1070
  %v1072 = vrot.slane %v1071, 2
  %v1073 = vadd.f32 %v1071, %v1072
  %v1074 = vrot.slane %v1073, 1
  %v1075 = vadd.f32 %v1073, %v1074
  %v1076 = vsel %vm528, %v184, 0.0
  %v1077 = vsel %vm528, %v185, 0.0
  %v1078 = vadd.f32 %v1076, %v1077
  %v1079 = vsel %vm528, %v186, 0.0
  %v1080 = vadd.f32 %v1078, %v1079
  %v1081 = vsel %vm534, %v187, 0.0
  %v1082 = vadd.f32 %v1080, %v1081
  %v1083 = vrot.slane %v1082, 4
  %v1084 = vadd.f32 %v1082, %v1083
  %v1085 = vrot.slane %v1084, 2
  %v1086 = vadd.f32 %v1084, %v1085
  %v1087 = vrot.slane %v1086, 1
  %v1088 = vadd.f32 %v1086, %v1087
  %v1089 = vsel %vm528, %v188, 0.0
  %v1090 = vsel %vm528, %v189, 0.0
  %v1091 = vadd.f32 %v1089, %v1090
  %v1092 = vsel %vm528, %v190, 0.0
  %v1093 = vadd.f32 %v1091, %v1092
  %v1094 = vsel %vm534, %v191, 0.0
  %v1095 = vadd.f32 %v1093, %v1094
  %v1096 = vrot.slane %v1095, 4
  %v1097 = vadd.f32 %v1095, %v1096
  %v1098 = vrot.slane %v1097, 2
  %v1099 = vadd.f32 %v1097, %v1098
  %v1100 = vrot.slane %v1099, 1
  %v1101 = vadd.f32 %v1099, %v1100
  %v1102 = vsel %vm528, %v192, 0.0
  %v1103 = vsel %vm528, %v193, 0.0
  %v1104 = vadd.f32 %v1102, %v1103
  %v1105 = vsel %vm528, %v194, 0.0
  %v1106 = vadd.f32 %v1104, %v1105
  %v1107 = vsel %vm534, %v195, 0.0
  %v1108 = vadd.f32 %v1106, %v1107
  %v1109 = vrot.slane %v1108, 4
  %v1110 = vadd.f32 %v1108, %v1109
  %v1111 = vrot.slane %v1110, 2
  %v1112 = vadd.f32 %v1110, %v1111
  %v1113 = vrot.slane %v1112, 1
  %v1114 = vadd.f32 %v1112, %v1113
  %v1115 = vsel %vm528, %v196, 0.0
  %v1116 = vsel %vm528, %v197, 0.0
  %v1117 = vadd.f32 %v1115, %v1116
  %v1118 = vsel %vm528, %v198, 0.0
  %v1119 = vadd.f32 %v1117, %v1118
  %v1120 = vsel %vm534, %v199, 0.0
  %v1121 = vadd.f32 %v1119, %v1120
  %v1122 = vrot.slane %v1121, 4
  %v1123 = vadd.f32 %v1121, %v1122
  %v1124 = vrot.slane %v1123, 2
  %v1125 = vadd.f32 %v1123, %v1124
  %v1126 = vrot.slane %v1125, 1
  %v1127 = vadd.f32 %v1125, %v1126
  %v1128 = vsel %vm528, %v200, 0.0
  %v1129 = vsel %vm528, %v201, 0.0
  %v1130 = vadd.f32 %v1128, %v1129
  %v1131 = vsel %vm528, %v202, 0.0
  %v1132 = vadd.f32 %v1130, %v1131
  %v1133 = vsel %vm534, %v203, 0.0
  %v1134 = vadd.f32 %v1132, %v1133
  %v1135 = vrot.slane %v1134, 4
  %v1136 = vadd.f32 %v1134, %v1135
  %v1137 = vrot.slane %v1136, 2
  %v1138 = vadd.f32 %v1136, %v1137
  %v1139 = vrot.slane %v1138, 1
  %v1140 = vadd.f32 %v1138, %v1139
  %v1141 = vsel %vm528, %v204, 0.0
  %v1142 = vsel %vm528, %v205, 0.0
  %v1143 = vadd.f32 %v1141, %v1142
  %v1144 = vsel %vm528, %v206, 0.0
  %v1145 = vadd.f32 %v1143, %v1144
  %v1146 = vsel %vm534, %v207, 0.0
  %v1147 = vadd.f32 %v1145, %v1146
  %v1148 = vrot.slane %v1147, 4
  %v1149 = vadd.f32 %v1147, %v1148
  %v1150 = vrot.slane %v1149, 2
  %v1151 = vadd.f32 %v1149, %v1150
  %v1152 = vrot.slane %v1151, 1
  %v1153 = vadd.f32 %v1151, %v1152
  %v1154 = vsel %vm528, %v208, 0.0
  %v1155 = vsel %vm528, %v209, 0.0
  %v1156 = vadd.f32 %v1154, %v1155
  %v1157 = vsel %vm528, %v210, 0.0
  %v1158 = vadd.f32 %v1156, %v1157
  %v1159 = vsel %vm534, %v211, 0.0
  %v1160 = vadd.f32 %v1158, %v1159
  %v1161 = vrot.slane %v1160, 4
  %v1162 = vadd.f32 %v1160, %v1161
  %v1163 = vrot.slane %v1162, 2
  %v1164 = vadd.f32 %v1162, %v1163
  %v1165 = vrot.slane %v1164, 1
  %v1166 = vadd.f32 %v1164, %v1165
  %v1167 = vsel %vm528, %v212, 0.0
  %v1168 = vsel %vm528, %v213, 0.0
  %v1169 = vadd.f32 %v1167, %v1168
  %v1170 = vsel %vm528, %v214, 0.0
  %v1171 = vadd.f32 %v1169, %v1170
  %v1172 = vsel %vm534, %v215, 0.0
  %v1173 = vadd.f32 %v1171, %v1172
  %v1174 = vrot.slane %v1173, 4
  %v1175 = vadd.f32 %v1173, %v1174
  %v1176 = vrot.slane %v1175, 2
  %v1177 = vadd.f32 %v1175, %v1176
  %v1178 = vrot.slane %v1177, 1
  %v1179 = vadd.f32 %v1177, %v1178
  %v1180 = vsel %vm528, %v216, 0.0
  %v1181 = vsel %vm528, %v217, 0.0
  %v1182 = vadd.f32 %v1180, %v1181
  %v1183 = vsel %vm528, %v218, 0.0
  %v1184 = vadd.f32 %v1182, %v1183
  %v1185 = vsel %vm534, %v219, 0.0
  %v1186 = vadd.f32 %v1184, %v1185
  %v1187 = vrot.slane %v1186, 4
  %v1188 = vadd.f32 %v1186, %v1187
  %v1189 = vrot.slane %v1188, 2
  %v1190 = vadd.f32 %v1188, %v1189
  %v1191 = vrot.slane %v1190, 1
  %v1192 = vadd.f32 %v1190, %v1191
  %v1193 = vsel %vm528, %v220, 0.0
  %v1194 = vsel %vm528, %v221, 0.0
  %v1195 = vadd.f32 %v1193, %v1194
  %v1196 = vsel %vm528, %v222, 0.0
  %v1197 = vadd.f32 %v1195, %v1196
  %v1198 = vsel %vm534, %v223, 0.0
  %v1199 = vadd.f32 %v1197, %v1198
  %v1200 = vrot.slane %v1199, 4
  %v1201 = vadd.f32 %v1199, %v1200
  %v1202 = vrot.slane %v1201, 2
  %v1203 = vadd.f32 %v1201, %v1202
  %v1204 = vrot.slane %v1203, 1
  %v1205 = vadd.f32 %v1203, %v1204
  %v1206 = vsel %vm528, %v224, 0.0
  %v1207 = vsel %vm528, %v225, 0.0
  %v1208 = vadd.f32 %v1206, %v1207
  %v1209 = vsel %vm528, %v226, 0.0
  %v1210 = vadd.f32 %v1208, %v1209
  %v1211 = vsel %vm534, %v227, 0.0
  %v1212 = vadd.f32 %v1210, %v1211
  %v1213 = vrot.slane %v1212, 4
  %v1214 = vadd.f32 %v1212, %v1213
  %v1215 = vrot.slane %v1214, 2
  %v1216 = vadd.f32 %v1214, %v1215
  %v1217 = vrot.slane %v1216, 1
  %v1218 = vadd.f32 %v1216, %v1217
  %v1219 = vsel %vm528, %v228, 0.0
  %v1220 = vsel %vm528, %v229, 0.0
  %v1221 = vadd.f32 %v1219, %v1220
  %v1222 = vsel %vm528, %v230, 0.0
  %v1223 = vadd.f32 %v1221, %v1222
  %v1224 = vsel %vm534, %v231, 0.0
  %v1225 = vadd.f32 %v1223, %v1224
  %v1226 = vrot.slane %v1225, 4
  %v1227 = vadd.f32 %v1225, %v1226
  %v1228 = vrot.slane %v1227, 2
  %v1229 = vadd.f32 %v1227, %v1228
  %v1230 = vrot.slane %v1229, 1
  %v1231 = vadd.f32 %v1229, %v1230
  %v1232 = vsel %vm528, %v232, 0.0
  %v1233 = vsel %vm528, %v233, 0.0
  %v1234 = vadd.f32 %v1232, %v1233
  %v1235 = vsel %vm528, %v234, 0.0
  %v1236 = vadd.f32 %v1234, %v1235
  %v1237 = vsel %vm534, %v235, 0.0
  %v1238 = vadd.f32 %v1236, %v1237
  %v1239 = vrot.slane %v1238, 4
  %v1240 = vadd.f32 %v1238, %v1239
  %v1241 = vrot.slane %v1240, 2
  %v1242 = vadd.f32 %v1240, %v1241
  %v1243 = vrot.slane %v1242, 1
  %v1244 = vadd.f32 %v1242, %v1243
  %v1245 = vsel %vm528, %v236, 0.0
  %v1246 = vsel %vm528, %v237, 0.0
  %v1247 = vadd.f32 %v1245, %v1246
  %v1248 = vsel %vm528, %v238, 0.0
  %v1249 = vadd.f32 %v1247, %v1248
  %v1250 = vsel %vm534, %v239, 0.0
  %v1251 = vadd.f32 %v1249, %v1250
  %v1252 = vrot.slane %v1251, 4
  %v1253 = vadd.f32 %v1251, %v1252
  %v1254 = vrot.slane %v1253, 2
  %v1255 = vadd.f32 %v1253, %v1254
  %v1256 = vrot.slane %v1255, 1
  %v1257 = vadd.f32 %v1255, %v1256
  %v1258 = vsel %vm528, %v240, 0.0
  %v1259 = vsel %vm528, %v241, 0.0
  %v1260 = vadd.f32 %v1258, %v1259
  %v1261 = vsel %vm528, %v242, 0.0
  %v1262 = vadd.f32 %v1260, %v1261
  %v1263 = vsel %vm534, %v243, 0.0
  %v1264 = vadd.f32 %v1262, %v1263
  %v1265 = vrot.slane %v1264, 4
  %v1266 = vadd.f32 %v1264, %v1265
  %v1267 = vrot.slane %v1266, 2
  %v1268 = vadd.f32 %v1266, %v1267
  %v1269 = vrot.slane %v1268, 1
  %v1270 = vadd.f32 %v1268, %v1269
  %v1271 = vsel %vm528, %v244, 0.0
  %v1272 = vsel %vm528, %v245, 0.0
  %v1273 = vadd.f32 %v1271, %v1272
  %v1274 = vsel %vm528, %v246, 0.0
  %v1275 = vadd.f32 %v1273, %v1274
  %v1276 = vsel %vm534, %v247, 0.0
  %v1277 = vadd.f32 %v1275, %v1276
  %v1278 = vrot.slane %v1277, 4
  %v1279 = vadd.f32 %v1277, %v1278
  %v1280 = vrot.slane %v1279, 2
  %v1281 = vadd.f32 %v1279, %v1280
  %v1282 = vrot.slane %v1281, 1
  %v1283 = vadd.f32 %v1281, %v1282
  %v1284 = vsel %vm528, %v248, 0.0
  %v1285 = vsel %vm528, %v249, 0.0
  %v1286 = vadd.f32 %v1284, %v1285
  %v1287 = vsel %vm528, %v250, 0.0
  %v1288 = vadd.f32 %v1286, %v1287
  %v1289 = vsel %vm534, %v251, 0.0
  %v1290 = vadd.f32 %v1288, %v1289
  %v1291 = vrot.slane %v1290, 4
  %v1292 = vadd.f32 %v1290, %v1291
  %v1293 = vrot.slane %v1292, 2
  %v1294 = vadd.f32 %v1292, %v1293
  %v1295 = vrot.slane %v1294, 1
  %v1296 = vadd.f32 %v1294, %v1295
  %v1297 = vsel %vm528, %v252, 0.0
  %v1298 = vsel %vm528, %v253, 0.0
  %v1299 = vadd.f32 %v1297, %v1298
  %v1300 = vsel %vm528, %v254, 0.0
  %v1301 = vadd.f32 %v1299, %v1300
  %v1302 = vsel %vm534, %v255, 0.0
  %v1303 = vadd.f32 %v1301, %v1302
  %v1304 = vrot.slane %v1303, 4
  %v1305 = vadd.f32 %v1303, %v1304
  %v1306 = vrot.slane %v1305, 2
  %v1307 = vadd.f32 %v1305, %v1306
  %v1308 = vrot.slane %v1307, 1
  %v1309 = vadd.f32 %v1307, %v1308
  %v1310 = vsel %vm528, %v256, 0.0
  %v1311 = vsel %vm528, %v257, 0.0
  %v1312 = vadd.f32 %v1310, %v1311
  %v1313 = vsel %vm528, %v258, 0.0
  %v1314 = vadd.f32 %v1312, %v1313
  %v1315 = vsel %vm534, %v259, 0.0
  %v1316 = vadd.f32 %v1314, %v1315
  %v1317 = vrot.slane %v1316, 4
  %v1318 = vadd.f32 %v1316, %v1317
  %v1319 = vrot.slane %v1318, 2
  %v1320 = vadd.f32 %v1318, %v1319
  %v1321 = vrot.slane %v1320, 1
  %v1322 = vadd.f32 %v1320, %v1321
  %v1323 = vsel %vm528, %v260, 0.0
  %v1324 = vsel %vm528, %v261, 0.0
  %v1325 = vadd.f32 %v1323, %v1324
  %v1326 = vsel %vm528, %v262, 0.0
  %v1327 = vadd.f32 %v1325, %v1326
  %v1328 = vsel %vm534, %v263, 0.0
  %v1329 = vadd.f32 %v1327, %v1328
  %v1330 = vrot.slane %v1329, 4
  %v1331 = vadd.f32 %v1329, %v1330
  %v1332 = vrot.slane %v1331, 2
  %v1333 = vadd.f32 %v1331, %v1332
  %v1334 = vrot.slane %v1333, 1
  %v1335 = vadd.f32 %v1333, %v1334
  %v1336 = vsel %vm528, %v264, 0.0
  %v1337 = vsel %vm528, %v265, 0.0
  %v1338 = vadd.f32 %v1336, %v1337
  %v1339 = vsel %vm528, %v266, 0.0
  %v1340 = vadd.f32 %v1338, %v1339
  %v1341 = vsel %vm534, %v267, 0.0
  %v1342 = vadd.f32 %v1340, %v1341
  %v1343 = vrot.slane %v1342, 4
  %v1344 = vadd.f32 %v1342, %v1343
  %v1345 = vrot.slane %v1344, 2
  %v1346 = vadd.f32 %v1344, %v1345
  %v1347 = vrot.slane %v1346, 1
  %v1348 = vadd.f32 %v1346, %v1347
  %v1349 = vsel %vm528, %v268, 0.0
  %v1350 = vsel %vm528, %v269, 0.0
  %v1351 = vadd.f32 %v1349, %v1350
  %v1352 = vsel %vm528, %v270, 0.0
  %v1353 = vadd.f32 %v1351, %v1352
  %v1354 = vsel %vm534, %v271, 0.0
  %v1355 = vadd.f32 %v1353, %v1354
  %v1356 = vrot.slane %v1355, 4
  %v1357 = vadd.f32 %v1355, %v1356
  %v1358 = vrot.slane %v1357, 2
  %v1359 = vadd.f32 %v1357, %v1358
  %v1360 = vrot.slane %v1359, 1
  %v1361 = vadd.f32 %v1359, %v1360
  %v1362 = vsel %vm528, %v272, 0.0
  %v1363 = vsel %vm528, %v273, 0.0
  %v1364 = vadd.f32 %v1362, %v1363
  %v1365 = vsel %vm528, %v274, 0.0
  %v1366 = vadd.f32 %v1364, %v1365
  %v1367 = vsel %vm534, %v275, 0.0
  %v1368 = vadd.f32 %v1366, %v1367
  %v1369 = vrot.slane %v1368, 4
  %v1370 = vadd.f32 %v1368, %v1369
  %v1371 = vrot.slane %v1370, 2
  %v1372 = vadd.f32 %v1370, %v1371
  %v1373 = vrot.slane %v1372, 1
  %v1374 = vadd.f32 %v1372, %v1373
  %v1375 = vsel %vm528, %v276, 0.0
  %v1376 = vsel %vm528, %v277, 0.0
  %v1377 = vadd.f32 %v1375, %v1376
  %v1378 = vsel %vm528, %v278, 0.0
  %v1379 = vadd.f32 %v1377, %v1378
  %v1380 = vsel %vm534, %v279, 0.0
  %v1381 = vadd.f32 %v1379, %v1380
  %v1382 = vrot.slane %v1381, 4
  %v1383 = vadd.f32 %v1381, %v1382
  %v1384 = vrot.slane %v1383, 2
  %v1385 = vadd.f32 %v1383, %v1384
  %v1386 = vrot.slane %v1385, 1
  %v1387 = vadd.f32 %v1385, %v1386
  %v1388 = vsel %vm528, %v280, 0.0
  %v1389 = vsel %vm528, %v281, 0.0
  %v1390 = vadd.f32 %v1388, %v1389
  %v1391 = vsel %vm528, %v282, 0.0
  %v1392 = vadd.f32 %v1390, %v1391
  %v1393 = vsel %vm534, %v283, 0.0
  %v1394 = vadd.f32 %v1392, %v1393
  %v1395 = vrot.slane %v1394, 4
  %v1396 = vadd.f32 %v1394, %v1395
  %v1397 = vrot.slane %v1396, 2
  %v1398 = vadd.f32 %v1396, %v1397
  %v1399 = vrot.slane %v1398, 1
  %v1400 = vadd.f32 %v1398, %v1399
  %v1401 = vsel %vm528, %v284, 0.0
  %v1402 = vsel %vm528, %v285, 0.0
  %v1403 = vadd.f32 %v1401, %v1402
  %v1404 = vsel %vm528, %v286, 0.0
  %v1405 = vadd.f32 %v1403, %v1404
  %v1406 = vsel %vm534, %v287, 0.0
  %v1407 = vadd.f32 %v1405, %v1406
  %v1408 = vrot.slane %v1407, 4
  %v1409 = vadd.f32 %v1407, %v1408
  %v1410 = vrot.slane %v1409, 2
  %v1411 = vadd.f32 %v1409, %v1410
  %v1412 = vrot.slane %v1411, 1
  %v1413 = vadd.f32 %v1411, %v1412
  %v1414 = vsel %vm528, %v288, 0.0
  %v1415 = vsel %vm528, %v289, 0.0
  %v1416 = vadd.f32 %v1414, %v1415
  %v1417 = vsel %vm528, %v290, 0.0
  %v1418 = vadd.f32 %v1416, %v1417
  %v1419 = vsel %vm534, %v291, 0.0
  %v1420 = vadd.f32 %v1418, %v1419
  %v1421 = vrot.slane %v1420, 4
  %v1422 = vadd.f32 %v1420, %v1421
  %v1423 = vrot.slane %v1422, 2
  %v1424 = vadd.f32 %v1422, %v1423
  %v1425 = vrot.slane %v1424, 1
  %v1426 = vadd.f32 %v1424, %v1425
  %v1427 = vsel %vm528, %v292, 0.0
  %v1428 = vsel %vm528, %v293, 0.0
  %v1429 = vadd.f32 %v1427, %v1428
  %v1430 = vsel %vm528, %v294, 0.0
  %v1431 = vadd.f32 %v1429, %v1430
  %v1432 = vsel %vm534, %v295, 0.0
  %v1433 = vadd.f32 %v1431, %v1432
  %v1434 = vrot.slane %v1433, 4
  %v1435 = vadd.f32 %v1433, %v1434
  %v1436 = vrot.slane %v1435, 2
  %v1437 = vadd.f32 %v1435, %v1436
  %v1438 = vrot.slane %v1437, 1
  %v1439 = vadd.f32 %v1437, %v1438
  %v1440 = vsel %vm528, %v296, 0.0
  %v1441 = vsel %vm528, %v297, 0.0
  %v1442 = vadd.f32 %v1440, %v1441
  %v1443 = vsel %vm528, %v298, 0.0
  %v1444 = vadd.f32 %v1442, %v1443
  %v1445 = vsel %vm534, %v299, 0.0
  %v1446 = vadd.f32 %v1444, %v1445
  %v1447 = vrot.slane %v1446, 4
  %v1448 = vadd.f32 %v1446, %v1447
  %v1449 = vrot.slane %v1448, 2
  %v1450 = vadd.f32 %v1448, %v1449
  %v1451 = vrot.slane %v1450, 1
  %v1452 = vadd.f32 %v1450, %v1451
  %v1453 = vsel %vm528, %v300, 0.0
  %v1454 = vsel %vm528, %v301, 0.0
  %v1455 = vadd.f32 %v1453, %v1454
  %v1456 = vsel %vm528, %v302, 0.0
  %v1457 = vadd.f32 %v1455, %v1456
  %v1458 = vsel %vm534, %v303, 0.0
  %v1459 = vadd.f32 %v1457, %v1458
  %v1460 = vrot.slane %v1459, 4
  %v1461 = vadd.f32 %v1459, %v1460
  %v1462 = vrot.slane %v1461, 2
  %v1463 = vadd.f32 %v1461, %v1462
  %v1464 = vrot.slane %v1463, 1
  %v1465 = vadd.f32 %v1463, %v1464
  %v1466 = vsel %vm528, %v304, 0.0
  %v1467 = vsel %vm528, %v305, 0.0
  %v1468 = vadd.f32 %v1466, %v1467
  %v1469 = vsel %vm528, %v306, 0.0
  %v1470 = vadd.f32 %v1468, %v1469
  %v1471 = vsel %vm534, %v307, 0.0
  %v1472 = vadd.f32 %v1470, %v1471
  %v1473 = vrot.slane %v1472, 4
  %v1474 = vadd.f32 %v1472, %v1473
  %v1475 = vrot.slane %v1474, 2
  %v1476 = vadd.f32 %v1474, %v1475
  %v1477 = vrot.slane %v1476, 1
  %v1478 = vadd.f32 %v1476, %v1477
  %v1479 = vsel %vm528, %v308, 0.0
  %v1480 = vsel %vm528, %v309, 0.0
  %v1481 = vadd.f32 %v1479, %v1480
  %v1482 = vsel %vm528, %v310, 0.0
  %v1483 = vadd.f32 %v1481, %v1482
  %v1484 = vsel %vm534, %v311, 0.0
  %v1485 = vadd.f32 %v1483, %v1484
  %v1486 = vrot.slane %v1485, 4
  %v1487 = vadd.f32 %v1485, %v1486
  %v1488 = vrot.slane %v1487, 2
  %v1489 = vadd.f32 %v1487, %v1488
  %v1490 = vrot.slane %v1489, 1
  %v1491 = vadd.f32 %v1489, %v1490
  %v1492 = vsel %vm528, %v312, 0.0
  %v1493 = vsel %vm528, %v313, 0.0
  %v1494 = vadd.f32 %v1492, %v1493
  %v1495 = vsel %vm528, %v314, 0.0
  %v1496 = vadd.f32 %v1494, %v1495
  %v1497 = vsel %vm534, %v315, 0.0
  %v1498 = vadd.f32 %v1496, %v1497
  %v1499 = vrot.slane %v1498, 4
  %v1500 = vadd.f32 %v1498, %v1499
  %v1501 = vrot.slane %v1500, 2
  %v1502 = vadd.f32 %v1500, %v1501
  %v1503 = vrot.slane %v1502, 1
  %v1504 = vadd.f32 %v1502, %v1503
  %v1505 = vsel %vm528, %v316, 0.0
  %v1506 = vsel %vm528, %v317, 0.0
  %v1507 = vadd.f32 %v1505, %v1506
  %v1508 = vsel %vm528, %v318, 0.0
  %v1509 = vadd.f32 %v1507, %v1508
  %v1510 = vsel %vm534, %v319, 0.0
  %v1511 = vadd.f32 %v1509, %v1510
  %v1512 = vrot.slane %v1511, 4
  %v1513 = vadd.f32 %v1511, %v1512
  %v1514 = vrot.slane %v1513, 2
  %v1515 = vadd.f32 %v1513, %v1514
  %v1516 = vrot.slane %v1515, 1
  %v1517 = vadd.f32 %v1515, %v1516
  %v1518 = vsel %vm528, %v320, 0.0
  %v1519 = vsel %vm528, %v321, 0.0
  %v1520 = vadd.f32 %v1518, %v1519
  %v1521 = vsel %vm528, %v322, 0.0
  %v1522 = vadd.f32 %v1520, %v1521
  %v1523 = vsel %vm534, %v323, 0.0
  %v1524 = vadd.f32 %v1522, %v1523
  %v1525 = vrot.slane %v1524, 4
  %v1526 = vadd.f32 %v1524, %v1525
  %v1527 = vrot.slane %v1526, 2
  %v1528 = vadd.f32 %v1526, %v1527
  %v1529 = vrot.slane %v1528, 1
  %v1530 = vadd.f32 %v1528, %v1529
  %v1531 = vsel %vm528, %v324, 0.0
  %v1532 = vsel %vm528, %v325, 0.0
  %v1533 = vadd.f32 %v1531, %v1532
  %v1534 = vsel %vm528, %v326, 0.0
  %v1535 = vadd.f32 %v1533, %v1534
  %v1536 = vsel %vm534, %v327, 0.0
  %v1537 = vadd.f32 %v1535, %v1536
  %v1538 = vrot.slane %v1537, 4
  %v1539 = vadd.f32 %v1537, %v1538
  %v1540 = vrot.slane %v1539, 2
  %v1541 = vadd.f32 %v1539, %v1540
  %v1542 = vrot.slane %v1541, 1
  %v1543 = vadd.f32 %v1541, %v1542
  %v1544 = vsel %vm528, %v328, 0.0
  %v1545 = vsel %vm528, %v329, 0.0
  %v1546 = vadd.f32 %v1544, %v1545
  %v1547 = vsel %vm528, %v330, 0.0
  %v1548 = vadd.f32 %v1546, %v1547
  %v1549 = vsel %vm534, %v331, 0.0
  %v1550 = vadd.f32 %v1548, %v1549
  %v1551 = vrot.slane %v1550, 4
  %v1552 = vadd.f32 %v1550, %v1551
  %v1553 = vrot.slane %v1552, 2
  %v1554 = vadd.f32 %v1552, %v1553
  %v1555 = vrot.slane %v1554, 1
  %v1556 = vadd.f32 %v1554, %v1555
  %v1557 = vsel %vm528, %v332, 0.0
  %v1558 = vsel %vm528, %v333, 0.0
  %v1559 = vadd.f32 %v1557, %v1558
  %v1560 = vsel %vm528, %v334, 0.0
  %v1561 = vadd.f32 %v1559, %v1560
  %v1562 = vsel %vm534, %v335, 0.0
  %v1563 = vadd.f32 %v1561, %v1562
  %v1564 = vrot.slane %v1563, 4
  %v1565 = vadd.f32 %v1563, %v1564
  %v1566 = vrot.slane %v1565, 2
  %v1567 = vadd.f32 %v1565, %v1566
  %v1568 = vrot.slane %v1567, 1
  %v1569 = vadd.f32 %v1567, %v1568
  %v1570 = vsel %vm528, %v336, 0.0
  %v1571 = vsel %vm528, %v337, 0.0
  %v1572 = vadd.f32 %v1570, %v1571
  %v1573 = vsel %vm528, %v338, 0.0
  %v1574 = vadd.f32 %v1572, %v1573
  %v1575 = vsel %vm534, %v339, 0.0
  %v1576 = vadd.f32 %v1574, %v1575
  %v1577 = vrot.slane %v1576, 4
  %v1578 = vadd.f32 %v1576, %v1577
  %v1579 = vrot.slane %v1578, 2
  %v1580 = vadd.f32 %v1578, %v1579
  %v1581 = vrot.slane %v1580, 1
  %v1582 = vadd.f32 %v1580, %v1581
  %v1583 = vsel %vm528, %v340, 0.0
  %v1584 = vsel %vm528, %v341, 0.0
  %v1585 = vadd.f32 %v1583, %v1584
  %v1586 = vsel %vm528, %v342, 0.0
  %v1587 = vadd.f32 %v1585, %v1586
  %v1588 = vsel %vm534, %v343, 0.0
  %v1589 = vadd.f32 %v1587, %v1588
  %v1590 = vrot.slane %v1589, 4
  %v1591 = vadd.f32 %v1589, %v1590
  %v1592 = vrot.slane %v1591, 2
  %v1593 = vadd.f32 %v1591, %v1592
  %v1594 = vrot.slane %v1593, 1
  %v1595 = vadd.f32 %v1593, %v1594
  %v1596 = vsel %vm528, %v344, 0.0
  %v1597 = vsel %vm528, %v345, 0.0
  %v1598 = vadd.f32 %v1596, %v1597
  %v1599 = vsel %vm528, %v346, 0.0
  %v1600 = vadd.f32 %v1598, %v1599
  %v1601 = vsel %vm534, %v347, 0.0
  %v1602 = vadd.f32 %v1600, %v1601
  %v1603 = vrot.slane %v1602, 4
  %v1604 = vadd.f32 %v1602, %v1603
  %v1605 = vrot.slane %v1604, 2
  %v1606 = vadd.f32 %v1604, %v1605
  %v1607 = vrot.slane %v1606, 1
  %v1608 = vadd.f32 %v1606, %v1607
  %v1609 = vsel %vm528, %v348, 0.0
  %v1610 = vsel %vm528, %v349, 0.0
  %v1611 = vadd.f32 %v1609, %v1610
  %v1612 = vsel %vm528, %v350, 0.0
  %v1613 = vadd.f32 %v1611, %v1612
  %v1614 = vsel %vm534, %v351, 0.0
  %v1615 = vadd.f32 %v1613, %v1614
  %v1616 = vrot.slane %v1615, 4
  %v1617 = vadd.f32 %v1615, %v1616
  %v1618 = vrot.slane %v1617, 2
  %v1619 = vadd.f32 %v1617, %v1618
  %v1620 = vrot.slane %v1619, 1
  %v1621 = vadd.f32 %v1619, %v1620
  %v1622 = vsel %vm528, %v352, 0.0
  %v1623 = vsel %vm528, %v353, 0.0
  %v1624 = vadd.f32 %v1622, %v1623
  %v1625 = vsel %vm528, %v354, 0.0
  %v1626 = vadd.f32 %v1624, %v1625
  %v1627 = vsel %vm534, %v355, 0.0
  %v1628 = vadd.f32 %v1626, %v1627
  %v1629 = vrot.slane %v1628, 4
  %v1630 = vadd.f32 %v1628, %v1629
  %v1631 = vrot.slane %v1630, 2
  %v1632 = vadd.f32 %v1630, %v1631
  %v1633 = vrot.slane %v1632, 1
  %v1634 = vadd.f32 %v1632, %v1633
  %v1635 = vsel %vm528, %v356, 0.0
  %v1636 = vsel %vm528, %v357, 0.0
  %v1637 = vadd.f32 %v1635, %v1636
  %v1638 = vsel %vm528, %v358, 0.0
  %v1639 = vadd.f32 %v1637, %v1638
  %v1640 = vsel %vm534, %v359, 0.0
  %v1641 = vadd.f32 %v1639, %v1640
  %v1642 = vrot.slane %v1641, 4
  %v1643 = vadd.f32 %v1641, %v1642
  %v1644 = vrot.slane %v1643, 2
  %v1645 = vadd.f32 %v1643, %v1644
  %v1646 = vrot.slane %v1645, 1
  %v1647 = vadd.f32 %v1645, %v1646
  %v1648 = vsel %vm528, %v360, 0.0
  %v1649 = vsel %vm528, %v361, 0.0
  %v1650 = vadd.f32 %v1648, %v1649
  %v1651 = vsel %vm528, %v362, 0.0
  %v1652 = vadd.f32 %v1650, %v1651
  %v1653 = vsel %vm534, %v363, 0.0
  %v1654 = vadd.f32 %v1652, %v1653
  %v1655 = vrot.slane %v1654, 4
  %v1656 = vadd.f32 %v1654, %v1655
  %v1657 = vrot.slane %v1656, 2
  %v1658 = vadd.f32 %v1656, %v1657
  %v1659 = vrot.slane %v1658, 1
  %v1660 = vadd.f32 %v1658, %v1659
  %v1661 = vsel %vm528, %v364, 0.0
  %v1662 = vsel %vm528, %v365, 0.0
  %v1663 = vadd.f32 %v1661, %v1662
  %v1664 = vsel %vm528, %v366, 0.0
  %v1665 = vadd.f32 %v1663, %v1664
  %v1666 = vsel %vm534, %v367, 0.0
  %v1667 = vadd.f32 %v1665, %v1666
  %v1668 = vrot.slane %v1667, 4
  %v1669 = vadd.f32 %v1667, %v1668
  %v1670 = vrot.slane %v1669, 2
  %v1671 = vadd.f32 %v1669, %v1670
  %v1672 = vrot.slane %v1671, 1
  %v1673 = vadd.f32 %v1671, %v1672
  %v1674 = vsel %vm528, %v368, 0.0
  %v1675 = vsel %vm528, %v369, 0.0
  %v1676 = vadd.f32 %v1674, %v1675
  %v1677 = vsel %vm528, %v370, 0.0
  %v1678 = vadd.f32 %v1676, %v1677
  %v1679 = vsel %vm534, %v371, 0.0
  %v1680 = vadd.f32 %v1678, %v1679
  %v1681 = vrot.slane %v1680, 4
  %v1682 = vadd.f32 %v1680, %v1681
  %v1683 = vrot.slane %v1682, 2
  %v1684 = vadd.f32 %v1682, %v1683
  %v1685 = vrot.slane %v1684, 1
  %v1686 = vadd.f32 %v1684, %v1685
  %v1687 = vsel %vm528, %v372, 0.0
  %v1688 = vsel %vm528, %v373, 0.0
  %v1689 = vadd.f32 %v1687, %v1688
  %v1690 = vsel %vm528, %v374, 0.0
  %v1691 = vadd.f32 %v1689, %v1690
  %v1692 = vsel %vm534, %v375, 0.0
  %v1693 = vadd.f32 %v1691, %v1692
  %v1694 = vrot.slane %v1693, 4
  %v1695 = vadd.f32 %v1693, %v1694
  %v1696 = vrot.slane %v1695, 2
  %v1697 = vadd.f32 %v1695, %v1696
  %v1698 = vrot.slane %v1697, 1
  %v1699 = vadd.f32 %v1697, %v1698
  %v1700 = vsel %vm528, %v376, 0.0
  %v1701 = vsel %vm528, %v377, 0.0
  %v1702 = vadd.f32 %v1700, %v1701
  %v1703 = vsel %vm528, %v378, 0.0
  %v1704 = vadd.f32 %v1702, %v1703
  %v1705 = vsel %vm534, %v379, 0.0
  %v1706 = vadd.f32 %v1704, %v1705
  %v1707 = vrot.slane %v1706, 4
  %v1708 = vadd.f32 %v1706, %v1707
  %v1709 = vrot.slane %v1708, 2
  %v1710 = vadd.f32 %v1708, %v1709
  %v1711 = vrot.slane %v1710, 1
  %v1712 = vadd.f32 %v1710, %v1711
  %v1713 = vsel %vm528, %v380, 0.0
  %v1714 = vsel %vm528, %v381, 0.0
  %v1715 = vadd.f32 %v1713, %v1714
  %v1716 = vsel %vm528, %v382, 0.0
  %v1717 = vadd.f32 %v1715, %v1716
  %v1718 = vsel %vm534, %v383, 0.0
  %v1719 = vadd.f32 %v1717, %v1718
  %v1720 = vrot.slane %v1719, 4
  %v1721 = vadd.f32 %v1719, %v1720
  %v1722 = vrot.slane %v1721, 2
  %v1723 = vadd.f32 %v1721, %v1722
  %v1724 = vrot.slane %v1723, 1
  %v1725 = vadd.f32 %v1723, %v1724
  %v1726 = vsel %vm528, %v384, 0.0
  %v1727 = vsel %vm528, %v385, 0.0
  %v1728 = vadd.f32 %v1726, %v1727
  %v1729 = vsel %vm528, %v386, 0.0
  %v1730 = vadd.f32 %v1728, %v1729
  %v1731 = vsel %vm534, %v387, 0.0
  %v1732 = vadd.f32 %v1730, %v1731
  %v1733 = vrot.slane %v1732, 4
  %v1734 = vadd.f32 %v1732, %v1733
  %v1735 = vrot.slane %v1734, 2
  %v1736 = vadd.f32 %v1734, %v1735
  %v1737 = vrot.slane %v1736, 1
  %v1738 = vadd.f32 %v1736, %v1737
  %v1739 = vsel %vm528, %v388, 0.0
  %v1740 = vsel %vm528, %v389, 0.0
  %v1741 = vadd.f32 %v1739, %v1740
  %v1742 = vsel %vm528, %v390, 0.0
  %v1743 = vadd.f32 %v1741, %v1742
  %v1744 = vsel %vm534, %v391, 0.0
  %v1745 = vadd.f32 %v1743, %v1744
  %v1746 = vrot.slane %v1745, 4
  %v1747 = vadd.f32 %v1745, %v1746
  %v1748 = vrot.slane %v1747, 2
  %v1749 = vadd.f32 %v1747, %v1748
  %v1750 = vrot.slane %v1749, 1
  %v1751 = vadd.f32 %v1749, %v1750
  %v1752 = vsel %vm528, %v392, 0.0
  %v1753 = vsel %vm528, %v393, 0.0
  %v1754 = vadd.f32 %v1752, %v1753
  %v1755 = vsel %vm528, %v394, 0.0
  %v1756 = vadd.f32 %v1754, %v1755
  %v1757 = vsel %vm534, %v395, 0.0
  %v1758 = vadd.f32 %v1756, %v1757
  %v1759 = vrot.slane %v1758, 4
  %v1760 = vadd.f32 %v1758, %v1759
  %v1761 = vrot.slane %v1760, 2
  %v1762 = vadd.f32 %v1760, %v1761
  %v1763 = vrot.slane %v1762, 1
  %v1764 = vadd.f32 %v1762, %v1763
  %v1765 = vsel %vm528, %v396, 0.0
  %v1766 = vsel %vm528, %v397, 0.0
  %v1767 = vadd.f32 %v1765, %v1766
  %v1768 = vsel %vm528, %v398, 0.0
  %v1769 = vadd.f32 %v1767, %v1768
  %v1770 = vsel %vm534, %v399, 0.0
  %v1771 = vadd.f32 %v1769, %v1770
  %v1772 = vrot.slane %v1771, 4
  %v1773 = vadd.f32 %v1771, %v1772
  %v1774 = vrot.slane %v1773, 2
  %v1775 = vadd.f32 %v1773, %v1774
  %v1776 = vrot.slane %v1775, 1
  %v1777 = vadd.f32 %v1775, %v1776
  %v1778 = vsel %vm528, %v400, 0.0
  %v1779 = vsel %vm528, %v401, 0.0
  %v1780 = vadd.f32 %v1778, %v1779
  %v1781 = vsel %vm528, %v402, 0.0
  %v1782 = vadd.f32 %v1780, %v1781
  %v1783 = vsel %vm534, %v403, 0.0
  %v1784 = vadd.f32 %v1782, %v1783
  %v1785 = vrot.slane %v1784, 4
  %v1786 = vadd.f32 %v1784, %v1785
  %v1787 = vrot.slane %v1786, 2
  %v1788 = vadd.f32 %v1786, %v1787
  %v1789 = vrot.slane %v1788, 1
  %v1790 = vadd.f32 %v1788, %v1789
  %v1791 = vsel %vm528, %v404, 0.0
  %v1792 = vsel %vm528, %v405, 0.0
  %v1793 = vadd.f32 %v1791, %v1792
  %v1794 = vsel %vm528, %v406, 0.0
  %v1795 = vadd.f32 %v1793, %v1794
  %v1796 = vsel %vm534, %v407, 0.0
  %v1797 = vadd.f32 %v1795, %v1796
  %v1798 = vrot.slane %v1797, 4
  %v1799 = vadd.f32 %v1797, %v1798
  %v1800 = vrot.slane %v1799, 2
  %v1801 = vadd.f32 %v1799, %v1800
  %v1802 = vrot.slane %v1801, 1
  %v1803 = vadd.f32 %v1801, %v1802
  %v1804 = vsel %vm528, %v408, 0.0
  %v1805 = vsel %vm528, %v409, 0.0
  %v1806 = vadd.f32 %v1804, %v1805
  %v1807 = vsel %vm528, %v410, 0.0
  %v1808 = vadd.f32 %v1806, %v1807
  %v1809 = vsel %vm534, %v411, 0.0
  %v1810 = vadd.f32 %v1808, %v1809
  %v1811 = vrot.slane %v1810, 4
  %v1812 = vadd.f32 %v1810, %v1811
  %v1813 = vrot.slane %v1812, 2
  %v1814 = vadd.f32 %v1812, %v1813
  %v1815 = vrot.slane %v1814, 1
  %v1816 = vadd.f32 %v1814, %v1815
  %v1817 = vsel %vm528, %v412, 0.0
  %v1818 = vsel %vm528, %v413, 0.0
  %v1819 = vadd.f32 %v1817, %v1818
  %v1820 = vsel %vm528, %v414, 0.0
  %v1821 = vadd.f32 %v1819, %v1820
  %v1822 = vsel %vm534, %v415, 0.0
  %v1823 = vadd.f32 %v1821, %v1822
  %v1824 = vrot.slane %v1823, 4
  %v1825 = vadd.f32 %v1823, %v1824
  %v1826 = vrot.slane %v1825, 2
  %v1827 = vadd.f32 %v1825, %v1826
  %v1828 = vrot.slane %v1827, 1
  %v1829 = vadd.f32 %v1827, %v1828
  %v1830 = vsel %vm528, %v416, 0.0
  %v1831 = vsel %vm528, %v417, 0.0
  %v1832 = vadd.f32 %v1830, %v1831
  %v1833 = vsel %vm528, %v418, 0.0
  %v1834 = vadd.f32 %v1832, %v1833
  %v1835 = vsel %vm534, %v419, 0.0
  %v1836 = vadd.f32 %v1834, %v1835
  %v1837 = vrot.slane %v1836, 4
  %v1838 = vadd.f32 %v1836, %v1837
  %v1839 = vrot.slane %v1838, 2
  %v1840 = vadd.f32 %v1838, %v1839
  %v1841 = vrot.slane %v1840, 1
  %v1842 = vadd.f32 %v1840, %v1841
  %v1843 = vsel %vm528, %v420, 0.0
  %v1844 = vsel %vm528, %v421, 0.0
  %v1845 = vadd.f32 %v1843, %v1844
  %v1846 = vsel %vm528, %v422, 0.0
  %v1847 = vadd.f32 %v1845, %v1846
  %v1848 = vsel %vm534, %v423, 0.0
  %v1849 = vadd.f32 %v1847, %v1848
  %v1850 = vrot.slane %v1849, 4
  %v1851 = vadd.f32 %v1849, %v1850
  %v1852 = vrot.slane %v1851, 2
  %v1853 = vadd.f32 %v1851, %v1852
  %v1854 = vrot.slane %v1853, 1
  %v1855 = vadd.f32 %v1853, %v1854
  %v1856 = vsel %vm528, %v424, 0.0
  %v1857 = vsel %vm528, %v425, 0.0
  %v1858 = vadd.f32 %v1856, %v1857
  %v1859 = vsel %vm528, %v426, 0.0
  %v1860 = vadd.f32 %v1858, %v1859
  %v1861 = vsel %vm534, %v427, 0.0
  %v1862 = vadd.f32 %v1860, %v1861
  %v1863 = vrot.slane %v1862, 4
  %v1864 = vadd.f32 %v1862, %v1863
  %v1865 = vrot.slane %v1864, 2
  %v1866 = vadd.f32 %v1864, %v1865
  %v1867 = vrot.slane %v1866, 1
  %v1868 = vadd.f32 %v1866, %v1867
  %v1869 = vsel %vm528, %v428, 0.0
  %v1870 = vsel %vm528, %v429, 0.0
  %v1871 = vadd.f32 %v1869, %v1870
  %v1872 = vsel %vm528, %v430, 0.0
  %v1873 = vadd.f32 %v1871, %v1872
  %v1874 = vsel %vm534, %v431, 0.0
  %v1875 = vadd.f32 %v1873, %v1874
  %v1876 = vrot.slane %v1875, 4
  %v1877 = vadd.f32 %v1875, %v1876
  %v1878 = vrot.slane %v1877, 2
  %v1879 = vadd.f32 %v1877, %v1878
  %v1880 = vrot.slane %v1879, 1
  %v1881 = vadd.f32 %v1879, %v1880
  %v1882 = vsel %vm528, %v432, 0.0
  %v1883 = vsel %vm528, %v433, 0.0
  %v1884 = vadd.f32 %v1882, %v1883
  %v1885 = vsel %vm528, %v434, 0.0
  %v1886 = vadd.f32 %v1884, %v1885
  %v1887 = vsel %vm534, %v435, 0.0
  %v1888 = vadd.f32 %v1886, %v1887
  %v1889 = vrot.slane %v1888, 4
  %v1890 = vadd.f32 %v1888, %v1889
  %v1891 = vrot.slane %v1890, 2
  %v1892 = vadd.f32 %v1890, %v1891
  %v1893 = vrot.slane %v1892, 1
  %v1894 = vadd.f32 %v1892, %v1893
  %v1895 = vsel %vm528, %v436, 0.0
  %v1896 = vsel %vm528, %v437, 0.0
  %v1897 = vadd.f32 %v1895, %v1896
  %v1898 = vsel %vm528, %v438, 0.0
  %v1899 = vadd.f32 %v1897, %v1898
  %v1900 = vsel %vm534, %v439, 0.0
  %v1901 = vadd.f32 %v1899, %v1900
  %v1902 = vrot.slane %v1901, 4
  %v1903 = vadd.f32 %v1901, %v1902
  %v1904 = vrot.slane %v1903, 2
  %v1905 = vadd.f32 %v1903, %v1904
  %v1906 = vrot.slane %v1905, 1
  %v1907 = vadd.f32 %v1905, %v1906
  %v1908 = vsel %vm528, %v440, 0.0
  %v1909 = vsel %vm528, %v441, 0.0
  %v1910 = vadd.f32 %v1908, %v1909
  %v1911 = vsel %vm528, %v442, 0.0
  %v1912 = vadd.f32 %v1910, %v1911
  %v1913 = vsel %vm534, %v443, 0.0
  %v1914 = vadd.f32 %v1912, %v1913
  %v1915 = vrot.slane %v1914, 4
  %v1916 = vadd.f32 %v1914, %v1915
  %v1917 = vrot.slane %v1916, 2
  %v1918 = vadd.f32 %v1916, %v1917
  %v1919 = vrot.slane %v1918, 1
  %v1920 = vadd.f32 %v1918, %v1919
  %v1921 = vsel %vm528, %v444, 0.0
  %v1922 = vsel %vm528, %v445, 0.0
  %v1923 = vadd.f32 %v1921, %v1922
  %v1924 = vsel %vm528, %v446, 0.0
  %v1925 = vadd.f32 %v1923, %v1924
  %v1926 = vsel %vm534, %v447, 0.0
  %v1927 = vadd.f32 %v1925, %v1926
  %v1928 = vrot.slane %v1927, 4
  %v1929 = vadd.f32 %v1927, %v1928
  %v1930 = vrot.slane %v1929, 2
  %v1931 = vadd.f32 %v1929, %v1930
  %v1932 = vrot.slane %v1931, 1
  %v1933 = vadd.f32 %v1931, %v1932
  %v1934 = vsel %vm528, %v448, 0.0
  %v1935 = vsel %vm528, %v449, 0.0
  %v1936 = vadd.f32 %v1934, %v1935
  %v1937 = vsel %vm528, %v450, 0.0
  %v1938 = vadd.f32 %v1936, %v1937
  %v1939 = vsel %vm534, %v451, 0.0
  %v1940 = vadd.f32 %v1938, %v1939
  %v1941 = vrot.slane %v1940, 4
  %v1942 = vadd.f32 %v1940, %v1941
  %v1943 = vrot.slane %v1942, 2
  %v1944 = vadd.f32 %v1942, %v1943
  %v1945 = vrot.slane %v1944, 1
  %v1946 = vadd.f32 %v1944, %v1945
  %v1947 = vsel %vm528, %v452, 0.0
  %v1948 = vsel %vm528, %v453, 0.0
  %v1949 = vadd.f32 %v1947, %v1948
  %v1950 = vsel %vm528, %v454, 0.0
  %v1951 = vadd.f32 %v1949, %v1950
  %v1952 = vsel %vm534, %v455, 0.0
  %v1953 = vadd.f32 %v1951, %v1952
  %v1954 = vrot.slane %v1953, 4
  %v1955 = vadd.f32 %v1953, %v1954
  %v1956 = vrot.slane %v1955, 2
  %v1957 = vadd.f32 %v1955, %v1956
  %v1958 = vrot.slane %v1957, 1
  %v1959 = vadd.f32 %v1957, %v1958
  %v1960 = vsel %vm528, %v456, 0.0
  %v1961 = vsel %vm528, %v457, 0.0
  %v1962 = vadd.f32 %v1960, %v1961
  %v1963 = vsel %vm528, %v458, 0.0
  %v1964 = vadd.f32 %v1962, %v1963
  %v1965 = vsel %vm534, %v459, 0.0
  %v1966 = vadd.f32 %v1964, %v1965
  %v1967 = vrot.slane %v1966, 4
  %v1968 = vadd.f32 %v1966, %v1967
  %v1969 = vrot.slane %v1968, 2
  %v1970 = vadd.f32 %v1968, %v1969
  %v1971 = vrot.slane %v1970, 1
  %v1972 = vadd.f32 %v1970, %v1971
  %v1973 = vsel %vm528, %v460, 0.0
  %v1974 = vsel %vm528, %v461, 0.0
  %v1975 = vadd.f32 %v1973, %v1974
  %v1976 = vsel %vm528, %v462, 0.0
  %v1977 = vadd.f32 %v1975, %v1976
  %v1978 = vsel %vm534, %v463, 0.0
  %v1979 = vadd.f32 %v1977, %v1978
  %v1980 = vrot.slane %v1979, 4
  %v1981 = vadd.f32 %v1979, %v1980
  %v1982 = vrot.slane %v1981, 2
  %v1983 = vadd.f32 %v1981, %v1982
  %v1984 = vrot.slane %v1983, 1
  %v1985 = vadd.f32 %v1983, %v1984
  %v1986 = vsel %vm528, %v464, 0.0
  %v1987 = vsel %vm528, %v465, 0.0
  %v1988 = vadd.f32 %v1986, %v1987
  %v1989 = vsel %vm528, %v466, 0.0
  %v1990 = vadd.f32 %v1988, %v1989
  %v1991 = vsel %vm534, %v467, 0.0
  %v1992 = vadd.f32 %v1990, %v1991
  %v1993 = vrot.slane %v1992, 4
  %v1994 = vadd.f32 %v1992, %v1993
  %v1995 = vrot.slane %v1994, 2
  %v1996 = vadd.f32 %v1994, %v1995
  %v1997 = vrot.slane %v1996, 1
  %v1998 = vadd.f32 %v1996, %v1997
  %v1999 = vsel %vm528, %v468, 0.0
  %v2000 = vsel %vm528, %v469, 0.0
  %v2001 = vadd.f32 %v1999, %v2000
  %v2002 = vsel %vm528, %v470, 0.0
  %v2003 = vadd.f32 %v2001, %v2002
  %v2004 = vsel %vm534, %v471, 0.0
  %v2005 = vadd.f32 %v2003, %v2004
  %v2006 = vrot.slane %v2005, 4
  %v2007 = vadd.f32 %v2005, %v2006
  %v2008 = vrot.slane %v2007, 2
  %v2009 = vadd.f32 %v2007, %v2008
  %v2010 = vrot.slane %v2009, 1
  %v2011 = vadd.f32 %v2009, %v2010
  %v2012 = vsel %vm528, %v472, 0.0
  %v2013 = vsel %vm528, %v473, 0.0
  %v2014 = vadd.f32 %v2012, %v2013
  %v2015 = vsel %vm528, %v474, 0.0
  %v2016 = vadd.f32 %v2014, %v2015
  %v2017 = vsel %vm534, %v475, 0.0
  %v2018 = vadd.f32 %v2016, %v2017
  %v2019 = vrot.slane %v2018, 4
  %v2020 = vadd.f32 %v2018, %v2019
  %v2021 = vrot.slane %v2020, 2
  %v2022 = vadd.f32 %v2020, %v2021
  %v2023 = vrot.slane %v2022, 1
  %v2024 = vadd.f32 %v2022, %v2023
  %v2025 = vsel %vm528, %v476, 0.0
  %v2026 = vsel %vm528, %v477, 0.0
  %v2027 = vadd.f32 %v2025, %v2026
  %v2028 = vsel %vm528, %v478, 0.0
  %v2029 = vadd.f32 %v2027, %v2028
  %v2030 = vsel %vm534, %v479, 0.0
  %v2031 = vadd.f32 %v2029, %v2030
  %v2032 = vrot.slane %v2031, 4
  %v2033 = vadd.f32 %v2031, %v2032
  %v2034 = vrot.slane %v2033, 2
  %v2035 = vadd.f32 %v2033, %v2034
  %v2036 = vrot.slane %v2035, 1
  %v2037 = vadd.f32 %v2035, %v2036
  %v2038 = vsel %vm528, %v480, 0.0
  %v2039 = vsel %vm528, %v481, 0.0
  %v2040 = vadd.f32 %v2038, %v2039
  %v2041 = vsel %vm528, %v482, 0.0
  %v2042 = vadd.f32 %v2040, %v2041
  %v2043 = vsel %vm534, %v483, 0.0
  %v2044 = vadd.f32 %v2042, %v2043
  %v2045 = vrot.slane %v2044, 4
  %v2046 = vadd.f32 %v2044, %v2045
  %v2047 = vrot.slane %v2046, 2
  %v2048 = vadd.f32 %v2046, %v2047
  %v2049 = vrot.slane %v2048, 1
  %v2050 = vadd.f32 %v2048, %v2049
  %v2051 = vsel %vm528, %v484, 0.0
  %v2052 = vsel %vm528, %v485, 0.0
  %v2053 = vadd.f32 %v2051, %v2052
  %v2054 = vsel %vm528, %v486, 0.0
  %v2055 = vadd.f32 %v2053, %v2054
  %v2056 = vsel %vm534, %v487, 0.0
  %v2057 = vadd.f32 %v2055, %v2056
  %v2058 = vrot.slane %v2057, 4
  %v2059 = vadd.f32 %v2057, %v2058
  %v2060 = vrot.slane %v2059, 2
  %v2061 = vadd.f32 %v2059, %v2060
  %v2062 = vrot.slane %v2061, 1
  %v2063 = vadd.f32 %v2061, %v2062
  %v2064 = vsel %vm528, %v488, 0.0
  %v2065 = vsel %vm528, %v489, 0.0
  %v2066 = vadd.f32 %v2064, %v2065
  %v2067 = vsel %vm528, %v490, 0.0
  %v2068 = vadd.f32 %v2066, %v2067
  %v2069 = vsel %vm534, %v491, 0.0
  %v2070 = vadd.f32 %v2068, %v2069
  %v2071 = vrot.slane %v2070, 4
  %v2072 = vadd.f32 %v2070, %v2071
  %v2073 = vrot.slane %v2072, 2
  %v2074 = vadd.f32 %v2072, %v2073
  %v2075 = vrot.slane %v2074, 1
  %v2076 = vadd.f32 %v2074, %v2075
  %v2077 = vsel %vm528, %v492, 0.0
  %v2078 = vsel %vm528, %v493, 0.0
  %v2079 = vadd.f32 %v2077, %v2078
  %v2080 = vsel %vm528, %v494, 0.0
  %v2081 = vadd.f32 %v2079, %v2080
  %v2082 = vsel %vm534, %v495, 0.0
  %v2083 = vadd.f32 %v2081, %v2082
  %v2084 = vrot.slane %v2083, 4
  %v2085 = vadd.f32 %v2083, %v2084
  %v2086 = vrot.slane %v2085, 2
  %v2087 = vadd.f32 %v2085, %v2086
  %v2088 = vrot.slane %v2087, 1
  %v2089 = vadd.f32 %v2087, %v2088
  %v2090 = vsel %vm528, %v496, 0.0
  %v2091 = vsel %vm528, %v497, 0.0
  %v2092 = vadd.f32 %v2090, %v2091
  %v2093 = vsel %vm528, %v498, 0.0
  %v2094 = vadd.f32 %v2092, %v2093
  %v2095 = vsel %vm534, %v499, 0.0
  %v2096 = vadd.f32 %v2094, %v2095
  %v2097 = vrot.slane %v2096, 4
  %v2098 = vadd.f32 %v2096, %v2097
  %v2099 = vrot.slane %v2098, 2
  %v2100 = vadd.f32 %v2098, %v2099
  %v2101 = vrot.slane %v2100, 1
  %v2102 = vadd.f32 %v2100, %v2101
  %v2103 = vsel %vm528, %v500, 0.0
  %v2104 = vsel %vm528, %v501, 0.0
  %v2105 = vadd.f32 %v2103, %v2104
  %v2106 = vsel %vm528, %v502, 0.0
  %v2107 = vadd.f32 %v2105, %v2106
  %v2108 = vsel %vm534, %v503, 0.0
  %v2109 = vadd.f32 %v2107, %v2108
  %v2110 = vrot.slane %v2109, 4
  %v2111 = vadd.f32 %v2109, %v2110
  %v2112 = vrot.slane %v2111, 2
  %v2113 = vadd.f32 %v2111, %v2112
  %v2114 = vrot.slane %v2113, 1
  %v2115 = vadd.f32 %v2113, %v2114
  %v2116 = vsel %vm528, %v504, 0.0
  %v2117 = vsel %vm528, %v505, 0.0
  %v2118 = vadd.f32 %v2116, %v2117
  %v2119 = vsel %vm528, %v506, 0.0
  %v2120 = vadd.f32 %v2118, %v2119
  %v2121 = vsel %vm534, %v507, 0.0
  %v2122 = vadd.f32 %v2120, %v2121
  %v2123 = vrot.slane %v2122, 4
  %v2124 = vadd.f32 %v2122, %v2123
  %v2125 = vrot.slane %v2124, 2
  %v2126 = vadd.f32 %v2124, %v2125
  %v2127 = vrot.slane %v2126, 1
  %v2128 = vadd.f32 %v2126, %v2127
  %v2129 = vsel %vm528, %v508, 0.0
  %v2130 = vsel %vm528, %v509, 0.0
  %v2131 = vadd.f32 %v2129, %v2130
  %v2132 = vsel %vm528, %v510, 0.0
  %v2133 = vadd.f32 %v2131, %v2132
  %v2134 = vsel %vm534, %v511, 0.0
  %v2135 = vadd.f32 %v2133, %v2134
  %v2136 = vrot.slane %v2135, 4
  %v2137 = vadd.f32 %v2135, %v2136
  %v2138 = vrot.slane %v2137, 2
  %v2139 = vadd.f32 %v2137, %v2138
  %v2140 = vrot.slane %v2139, 1
  %v2141 = vadd.f32 %v2139, %v2140
  %v2142 = vsel %vm528, %v512, 0.0
  %v2143 = vsel %vm528, %v513, 0.0
  %v2144 = vadd.f32 %v2142, %v2143
  %v2145 = vsel %vm528, %v514, 0.0
  %v2146 = vadd.f32 %v2144, %v2145
  %v2147 = vsel %vm534, %v515, 0.0
  %v2148 = vadd.f32 %v2146, %v2147
  %v2149 = vrot.slane %v2148, 4
  %v2150 = vadd.f32 %v2148, %v2149
  %v2151 = vrot.slane %v2150, 2
  %v2152 = vadd.f32 %v2150, %v2151
  %v2153 = vrot.slane %v2152, 1
  %v2154 = vadd.f32 %v2152, %v2153
  %v2155 = vsel %vm528, %v516, 0.0
  %v2156 = vsel %vm528, %v517, 0.0
  %v2157 = vadd.f32 %v2155, %v2156
  %v2158 = vsel %vm528, %v518, 0.0
  %v2159 = vadd.f32 %v2157, %v2158
  %v2160 = vsel %vm534, %v519, 0.0
  %v2161 = vadd.f32 %v2159, %v2160
  %v2162 = vrot.slane %v2161, 4
  %v2163 = vadd.f32 %v2161, %v2162
  %v2164 = vrot.slane %v2163, 2
  %v2165 = vadd.f32 %v2163, %v2164
  %v2166 = vrot.slane %v2165, 1
  %v2167 = vadd.f32 %v2165, %v2166
  %v2168 = vsel %vm528, %v520, 0.0
  %v2169 = vsel %vm528, %v521, 0.0
  %v2170 = vadd.f32 %v2168, %v2169
  %v2171 = vsel %vm528, %v522, 0.0
  %v2172 = vadd.f32 %v2170, %v2171
  %v2173 = vsel %vm534, %v523, 0.0
  %v2174 = vadd.f32 %v2172, %v2173
  %v2175 = vrot.slane %v2174, 4
  %v2176 = vadd.f32 %v2174, %v2175
  %v2177 = vrot.slane %v2176, 2
  %v2178 = vadd.f32 %v2176, %v2177
  %v2179 = vrot.slane %v2178, 1
  %v2180 = vadd.f32 %v2178, %v2179
  %v2181 = vsel %vm528, %v524, 0.0
  %v2182 = vsel %vm528, %v525, 0.0
  %v2183 = vadd.f32 %v2181, %v2182
  %v2184 = vsel %vm528, %v526, 0.0
  %v2185 = vadd.f32 %v2183, %v2184
  %v2186 = vsel %vm534, %v527, 0.0
  %v2187 = vadd.f32 %v2185, %v2186
  %v2188 = vrot.slane %v2187, 4
  %v2189 = vadd.f32 %v2187, %v2188
  %v2190 = vrot.slane %v2189, 2
  %v2191 = vadd.f32 %v2189, %v2190
  %v2192 = vrot.slane %v2191, 1
  %v2193 = vadd.f32 %v2191, %v2192
  %v2194 = vrcp.pop 25.0
  %v2195 = vmul.f32 %v542, %v2194
  %v2196 = vmul.f32 %v555, %v2194
  %v2197 = vmul.f32 %v568, %v2194
  %v2198 = vmul.f32 %v581, %v2194
  %v2199 = vmul.f32 %v594, %v2194
  %v2200 = vmul.f32 %v607, %v2194
  %v2201 = vmul.f32 %v620, %v2194
  %v2202 = vmul.f32 %v633, %v2194
  %v2203 = vmul.f32 %v646, %v2194
  %v2204 = vmul.f32 %v659, %v2194
  %v2205 = vmul.f32 %v672, %v2194
  %v2206 = vmul.f32 %v685, %v2194
  %v2207 = vmul.f32 %v698, %v2194
  %v2208 = vmul.f32 %v711, %v2194
  %v2209 = vmul.f32 %v724, %v2194
  %v2210 = vmul.f32 %v737, %v2194
  %v2211 = vmul.f32 %v750, %v2194
  %v2212 = vmul.f32 %v763, %v2194
  %v2213 = vmul.f32 %v776, %v2194
  %v2214 = vmul.f32 %v789, %v2194
  %v2215 = vmul.f32 %v802, %v2194
  %v2216 = vmul.f32 %v815, %v2194
  %v2217 = vmul.f32 %v828, %v2194
  %v2218 = vmul.f32 %v841, %v2194
  %v2219 = vmul.f32 %v854, %v2194
  %v2220 = vmul.f32 %v867, %v2194
  %v2221 = vmul.f32 %v880, %v2194
  %v2222 = vmul.f32 %v893, %v2194
  %v2223 = vmul.f32 %v906, %v2194
  %v2224 = vmul.f32 %v919, %v2194
  %v2225 = vmul.f32 %v932, %v2194
  %v2226 = vmul.f32 %v945, %v2194
  %v2227 = vmul.f32 %v958, %v2194
  %v2228 = vmul.f32 %v971, %v2194
  %v2229 = vmul.f32 %v984, %v2194
  %v2230 = vmul.f32 %v997, %v2194
  %v2231 = vmul.f32 %v1010, %v2194
  %v2232 = vmul.f32 %v1023, %v2194
  %v2233 = vmul.f32 %v1036, %v2194
  %v2234 = vmul.f32 %v1049, %v2194
  %v2235 = vmul.f32 %v1062, %v2194
  %v2236 = vmul.f32 %v1075, %v2194
  %v2237 = vmul.f32 %v1088, %v2194
  %v2238 = vmul.f32 %v1101, %v2194
  %v2239 = vmul.f32 %v1114, %v2194
  %v2240 = vmul.f32 %v1127, %v2194
  %v2241 = vmul.f32 %v1140, %v2194
  %v2242 = vmul.f32 %v1153, %v2194
  %v2243 = vmul.f32 %v1166, %v2194
  %v2244 = vmul.f32 %v1179, %v2194
  %v2245 = vmul.f32 %v1192, %v2194
  %v2246 = vmul.f32 %v1205, %v2194
  %v2247 = vmul.f32 %v1218, %v2194
  %v2248 = vmul.f32 %v1231, %v2194
  %v2249 = vmul.f32 %v1244, %v2194
  %v2250 = vmul.f32 %v1257, %v2194
  %v2251 = vmul.f32 %v1270, %v2194
  %v2252 = vmul.f32 %v1283, %v2194
  %v2253 = vmul.f32 %v1296, %v2194
  %v2254 = vmul.f32 %v1309, %v2194
  %v2255 = vmul.f32 %v1322, %v2194
  %v2256 = vmul.f32 %v1335, %v2194
  %v2257 = vmul.f32 %v1348, %v2194
  %v2258 = vmul.f32 %v1361, %v2194
  %v2259 = vmul.f32 %v1374, %v2194
  %v2260 = vmul.f32 %v1387, %v2194
  %v2261 = vmul.f32 %v1400, %v2194
  %v2262 = vmul.f32 %v1413, %v2194
  %v2263 = vmul.f32 %v1426, %v2194
  %v2264 = vmul.f32 %v1439, %v2194
  %v2265 = vmul.f32 %v1452, %v2194
  %v2266 = vmul.f32 %v1465, %v2194
  %v2267 = vmul.f32 %v1478, %v2194
  %v2268 = vmul.f32 %v1491, %v2194
  %v2269 = vmul.f32 %v1504, %v2194
  %v2270 = vmul.f32 %v1517, %v2194
  %v2271 = vmul.f32 %v1530, %v2194
  %v2272 = vmul.f32 %v1543, %v2194
  %v2273 = vmul.f32 %v1556, %v2194
  %v2274 = vmul.f32 %v1569, %v2194
  %v2275 = vmul.f32 %v1582, %v2194
  %v2276 = vmul.f32 %v1595, %v2194
  %v2277 = vmul.f32 %v1608, %v2194
  %v2278 = vmul.f32 %v1621, %v2194
  %v2279 = vmul.f32 %v1634, %v2194
  %v2280 = vmul.f32 %v1647, %v2194
  %v2281 = vmul.f32 %v1660, %v2194
  %v2282 = vmul.f32 %v1673, %v2194
  %v2283 = vmul.f32 %v1686, %v2194
  %v2284 = vmul.f32 %v1699, %v2194
  %v2285 = vmul.f32 %v1712, %v2194
  %v2286 = vmul.f32 %v1725, %v2194
  %v2287 = vmul.f32 %v1738, %v2194
  %v2288 = vmul.f32 %v1751, %v2194
  %v2289 = vmul.f32 %v1764, %v2194
  %v2290 = vmul.f32 %v1777, %v2194
  %v2291 = vmul.f32 %v1790, %v2194
  %v2292 = vmul.f32 %v1803, %v2194
  %v2293 = vmul.f32 %v1816, %v2194
  %v2294 = vmul.f32 %v1829, %v2194
  %v2295 = vmul.f32 %v1842, %v2194
  %v2296 = vmul.f32 %v1855, %v2194
  %v2297 = vmul.f32 %v1868, %v2194
  %v2298 = vmul.f32 %v1881, %v2194
  %v2299 = vmul.f32 %v1894, %v2194
  %v2300 = vmul.f32 %v1907, %v2194
  %v2301 = vmul.f32 %v1920, %v2194
  %v2302 = vmul.f32 %v1933, %v2194
  %v2303 = vmul.f32 %v1946, %v2194
  %v2304 = vmul.f32 %v1959, %v2194
  %v2305 = vmul.f32 %v1972, %v2194
  %v2306 = vmul.f32 %v1985, %v2194
  %v2307 = vmul.f32 %v1998, %v2194
  %v2308 = vmul.f32 %v2011, %v2194
  %v2309 = vmul.f32 %v2024, %v2194
  %v2310 = vmul.f32 %v2037, %v2194
  %v2311 = vmul.f32 %v2050, %v2194
  %v2312 = vmul.f32 %v2063, %v2194
  %v2313 = vmul.f32 %v2076, %v2194
  %v2314 = vmul.f32 %v2089, %v2194
  %v2315 = vmul.f32 %v2102, %v2194
  %v2316 = vmul.f32 %v2115, %v2194
  %v2317 = vmul.f32 %v2128, %v2194
  %v2318 = vmul.f32 %v2141, %v2194
  %v2319 = vmul.f32 %v2154, %v2194
  %v2320 = vmul.f32 %v2167, %v2194
  %v2321 = vmul.f32 %v2180, %v2194
  %v2322 = vmul.f32 %v2193, %v2194
  %v2323 = vpack.c.bf16 %v2195, %v2195
  %v2324 = vpack.c.bf16 %v2196, %v2196
  %v2325 = vpack.c.bf16 %v2197, %v2197
  %v2326 = vpack.c.bf16 %v2198, %v2198
  %v2327 = vpack.c.bf16 %v2199, %v2199
  %v2328 = vpack.c.bf16 %v2200, %v2200
  %v2329 = vpack.c.bf16 %v2201, %v2201
  %v2330 = vpack.c.bf16 %v2202, %v2202
  %v2331 = vpack.c.bf16 %v2203, %v2203
  %v2332 = vpack.c.bf16 %v2204, %v2204
  %v2333 = vpack.c.bf16 %v2205, %v2205
  %v2334 = vpack.c.bf16 %v2206, %v2206
  %v2335 = vpack.c.bf16 %v2207, %v2207
  %v2336 = vpack.c.bf16 %v2208, %v2208
  %v2337 = vpack.c.bf16 %v2209, %v2209
  %v2338 = vpack.c.bf16 %v2210, %v2210
  %v2339 = vpack.c.bf16 %v2211, %v2211
  %v2340 = vpack.c.bf16 %v2212, %v2212
  %v2341 = vpack.c.bf16 %v2213, %v2213
  %v2342 = vpack.c.bf16 %v2214, %v2214
  %v2343 = vpack.c.bf16 %v2215, %v2215
  %v2344 = vpack.c.bf16 %v2216, %v2216
  %v2345 = vpack.c.bf16 %v2217, %v2217
  %v2346 = vpack.c.bf16 %v2218, %v2218
  %v2347 = vpack.c.bf16 %v2219, %v2219
  %v2348 = vpack.c.bf16 %v2220, %v2220
  %v2349 = vpack.c.bf16 %v2221, %v2221
  %v2350 = vpack.c.bf16 %v2222, %v2222
  %v2351 = vpack.c.bf16 %v2223, %v2223
  %v2352 = vpack.c.bf16 %v2224, %v2224
  %v2353 = vpack.c.bf16 %v2225, %v2225
  %v2354 = vpack.c.bf16 %v2226, %v2226
  %v2355 = vpack.c.bf16 %v2227, %v2227
  %v2356 = vpack.c.bf16 %v2228, %v2228
  %v2357 = vpack.c.bf16 %v2229, %v2229
  %v2358 = vpack.c.bf16 %v2230, %v2230
  %v2359 = vpack.c.bf16 %v2231, %v2231
  %v2360 = vpack.c.bf16 %v2232, %v2232
  %v2361 = vpack.c.bf16 %v2233, %v2233
  %v2362 = vpack.c.bf16 %v2234, %v2234
  %v2363 = vpack.c.bf16 %v2235, %v2235
  %v2364 = vpack.c.bf16 %v2236, %v2236
  %v2365 = vpack.c.bf16 %v2237, %v2237
  %v2366 = vpack.c.bf16 %v2238, %v2238
  %v2367 = vpack.c.bf16 %v2239, %v2239
  %v2368 = vpack.c.bf16 %v2240, %v2240
  %v2369 = vpack.c.bf16 %v2241, %v2241
  %v2370 = vpack.c.bf16 %v2242, %v2242
  %v2371 = vpack.c.bf16 %v2243, %v2243
  %v2372 = vpack.c.bf16 %v2244, %v2244
  %v2373 = vpack.c.bf16 %v2245, %v2245
  %v2374 = vpack.c.bf16 %v2246, %v2246
  %v2375 = vpack.c.bf16 %v2247, %v2247
  %v2376 = vpack.c.bf16 %v2248, %v2248
  %v2377 = vpack.c.bf16 %v2249, %v2249
  %v2378 = vpack.c.bf16 %v2250, %v2250
  %v2379 = vpack.c.bf16 %v2251, %v2251
  %v2380 = vpack.c.bf16 %v2252, %v2252
  %v2381 = vpack.c.bf16 %v2253, %v2253
  %v2382 = vpack.c.bf16 %v2254, %v2254
  %v2383 = vpack.c.bf16 %v2255, %v2255
  %v2384 = vpack.c.bf16 %v2256, %v2256
  %v2385 = vpack.c.bf16 %v2257, %v2257
  %v2386 = vpack.c.bf16 %v2258, %v2258
  %v2387 = vpack.c.bf16 %v2259, %v2259
  %v2388 = vpack.c.bf16 %v2260, %v2260
  %v2389 = vpack.c.bf16 %v2261, %v2261
  %v2390 = vpack.c.bf16 %v2262, %v2262
  %v2391 = vpack.c.bf16 %v2263, %v2263
  %v2392 = vpack.c.bf16 %v2264, %v2264
  %v2393 = vpack.c.bf16 %v2265, %v2265
  %v2394 = vpack.c.bf16 %v2266, %v2266
  %v2395 = vpack.c.bf16 %v2267, %v2267
  %v2396 = vpack.c.bf16 %v2268, %v2268
  %v2397 = vpack.c.bf16 %v2269, %v2269
  %v2398 = vpack.c.bf16 %v2270, %v2270
  %v2399 = vpack.c.bf16 %v2271, %v2271
  %v2400 = vpack.c.bf16 %v2272, %v2272
  %v2401 = vpack.c.bf16 %v2273, %v2273
  %v2402 = vpack.c.bf16 %v2274, %v2274
  %v2403 = vpack.c.bf16 %v2275, %v2275
  %v2404 = vpack.c.bf16 %v2276, %v2276
  %v2405 = vpack.c.bf16 %v2277, %v2277
  %v2406 = vpack.c.bf16 %v2278, %v2278
  %v2407 = vpack.c.bf16 %v2279, %v2279
  %v2408 = vpack.c.bf16 %v2280, %v2280
  %v2409 = vpack.c.bf16 %v2281, %v2281
  %v2410 = vpack.c.bf16 %v2282, %v2282
  %v2411 = vpack.c.bf16 %v2283, %v2283
  %v2412 = vpack.c.bf16 %v2284, %v2284
  %v2413 = vpack.c.bf16 %v2285, %v2285
  %v2414 = vpack.c.bf16 %v2286, %v2286
  %v2415 = vpack.c.bf16 %v2287, %v2287
  %v2416 = vpack.c.bf16 %v2288, %v2288
  %v2417 = vpack.c.bf16 %v2289, %v2289
  %v2418 = vpack.c.bf16 %v2290, %v2290
  %v2419 = vpack.c.bf16 %v2291, %v2291
  %v2420 = vpack.c.bf16 %v2292, %v2292
  %v2421 = vpack.c.bf16 %v2293, %v2293
  %v2422 = vpack.c.bf16 %v2294, %v2294
  %v2423 = vpack.c.bf16 %v2295, %v2295
  %v2424 = vpack.c.bf16 %v2296, %v2296
  %v2425 = vpack.c.bf16 %v2297, %v2297
  %v2426 = vpack.c.bf16 %v2298, %v2298
  %v2427 = vpack.c.bf16 %v2299, %v2299
  %v2428 = vpack.c.bf16 %v2300, %v2300
  %v2429 = vpack.c.bf16 %v2301, %v2301
  %v2430 = vpack.c.bf16 %v2302, %v2302
  %v2431 = vpack.c.bf16 %v2303, %v2303
  %v2432 = vpack.c.bf16 %v2304, %v2304
  %v2433 = vpack.c.bf16 %v2305, %v2305
  %v2434 = vpack.c.bf16 %v2306, %v2306
  %v2435 = vpack.c.bf16 %v2307, %v2307
  %v2436 = vpack.c.bf16 %v2308, %v2308
  %v2437 = vpack.c.bf16 %v2309, %v2309
  %v2438 = vpack.c.bf16 %v2310, %v2310
  %v2439 = vpack.c.bf16 %v2311, %v2311
  %v2440 = vpack.c.bf16 %v2312, %v2312
  %v2441 = vpack.c.bf16 %v2313, %v2313
  %v2442 = vpack.c.bf16 %v2314, %v2314
  %v2443 = vpack.c.bf16 %v2315, %v2315
  %v2444 = vpack.c.bf16 %v2316, %v2316
  %v2445 = vpack.c.bf16 %v2317, %v2317
  %v2446 = vpack.c.bf16 %v2318, %v2318
  %v2447 = vpack.c.bf16 %v2319, %v2319
  %v2448 = vpack.c.bf16 %v2320, %v2320
  %v2449 = vpack.c.bf16 %v2321, %v2321
  %v2450 = vpack.c.bf16 %v2322, %v2322
  %v2451 = vld [vmem:[%s1] sm:$0xf]
  %v2452 = vld [vmem:[%s1 + $0x4] sm:$0xf]
  %v2453 = vld [vmem:[%s1 + $0x8] sm:$0xf]
  %v2454 = vld [vmem:[%s1 + $0xc] sm:$0xf]
  %v2583 = vunpack.c.l.b16 %v2323
  %v2584 = vunpack.c.l.b16 %v2324
  %v2585 = vunpack.c.l.b16 %v2325
  %v2586 = vunpack.c.l.b16 %v2326
  %v2587 = vunpack.c.l.b16 %v2327
  %v2588 = vunpack.c.l.b16 %v2328
  %v2589 = vunpack.c.l.b16 %v2329
  %v2590 = vunpack.c.l.b16 %v2330
  %v2591 = vunpack.c.l.b16 %v2331
  %v2592 = vunpack.c.l.b16 %v2332
  %v2593 = vunpack.c.l.b16 %v2333
  %v2594 = vunpack.c.l.b16 %v2334
  %v2595 = vunpack.c.l.b16 %v2335
  %v2596 = vunpack.c.l.b16 %v2336
  %v2597 = vunpack.c.l.b16 %v2337
  %v2598 = vunpack.c.l.b16 %v2338
  %v2599 = vunpack.c.l.b16 %v2339
  %v2600 = vunpack.c.l.b16 %v2340
  %v2601 = vunpack.c.l.b16 %v2341
  %v2602 = vunpack.c.l.b16 %v2342
  %v2603 = vunpack.c.l.b16 %v2343
  %v2604 = vunpack.c.l.b16 %v2344
  %v2605 = vunpack.c.l.b16 %v2345
  %v2606 = vunpack.c.l.b16 %v2346
  %v2607 = vunpack.c.l.b16 %v2347
  %v2608 = vunpack.c.l.b16 %v2348
  %v2609 = vunpack.c.l.b16 %v2349
  %v2610 = vunpack.c.l.b16 %v2350
  %v2611 = vunpack.c.l.b16 %v2351
  %v2612 = vunpack.c.l.b16 %v2352
  %v2613 = vunpack.c.l.b16 %v2353
  %v2614 = vunpack.c.l.b16 %v2354
  %v2615 = vunpack.c.l.b16 %v2355
  %v2616 = vunpack.c.l.b16 %v2356
  %v2617 = vunpack.c.l.b16 %v2357
  %v2618 = vunpack.c.l.b16 %v2358
  %v2619 = vunpack.c.l.b16 %v2359
  %v2620 = vunpack.c.l.b16 %v2360
  %v2621 = vunpack.c.l.b16 %v2361
  %v2622 = vunpack.c.l.b16 %v2362
  %v2623 = vunpack.c.l.b16 %v2363
  %v2624 = vunpack.c.l.b16 %v2364
  %v2625 = vunpack.c.l.b16 %v2365
  %v2626 = vunpack.c.l.b16 %v2366
  %v2627 = vunpack.c.l.b16 %v2367
  %v2628 = vunpack.c.l.b16 %v2368
  %v2629 = vunpack.c.l.b16 %v2369
  %v2630 = vunpack.c.l.b16 %v2370
  %v2631 = vunpack.c.l.b16 %v2371
  %v2632 = vunpack.c.l.b16 %v2372
  %v2633 = vunpack.c.l.b16 %v2373
  %v2634 = vunpack.c.l.b16 %v2374
  %v2635 = vunpack.c.l.b16 %v2375
  %v2636 = vunpack.c.l.b16 %v2376
  %v2637 = vunpack.c.l.b16 %v2377
  %v2638 = vunpack.c.l.b16 %v2378
  %v2639 = vunpack.c.l.b16 %v2379
  %v2640 = vunpack.c.l.b16 %v2380
  %v2641 = vunpack.c.l.b16 %v2381
  %v2642 = vunpack.c.l.b16 %v2382
  %v2643 = vunpack.c.l.b16 %v2383
  %v2644 = vunpack.c.l.b16 %v2384
  %v2645 = vunpack.c.l.b16 %v2385
  %v2646 = vunpack.c.l.b16 %v2386
  %v2647 = vunpack.c.l.b16 %v2387
  %v2648 = vunpack.c.l.b16 %v2388
  %v2649 = vunpack.c.l.b16 %v2389
  %v2650 = vunpack.c.l.b16 %v2390
  %v2651 = vunpack.c.l.b16 %v2391
  %v2652 = vunpack.c.l.b16 %v2392
  %v2653 = vunpack.c.l.b16 %v2393
  %v2654 = vunpack.c.l.b16 %v2394
  %v2655 = vunpack.c.l.b16 %v2395
  %v2656 = vunpack.c.l.b16 %v2396
  %v2657 = vunpack.c.l.b16 %v2397
  %v2658 = vunpack.c.l.b16 %v2398
  %v2659 = vunpack.c.l.b16 %v2399
  %v2660 = vunpack.c.l.b16 %v2400
  %v2661 = vunpack.c.l.b16 %v2401
  %v2662 = vunpack.c.l.b16 %v2402
  %v2663 = vunpack.c.l.b16 %v2403
  %v2664 = vunpack.c.l.b16 %v2404
  %v2665 = vunpack.c.l.b16 %v2405
  %v2666 = vunpack.c.l.b16 %v2406
  %v2667 = vunpack.c.l.b16 %v2407
  %v2668 = vunpack.c.l.b16 %v2408
  %v2669 = vunpack.c.l.b16 %v2409
  %v2670 = vunpack.c.l.b16 %v2410
  %v2671 = vunpack.c.l.b16 %v2411
  %v2672 = vunpack.c.l.b16 %v2412
  %v2673 = vunpack.c.l.b16 %v2413
  %v2674 = vunpack.c.l.b16 %v2414
  %v2675 = vunpack.c.l.b16 %v2415
  %v2676 = vunpack.c.l.b16 %v2416
  %v2677 = vunpack.c.l.b16 %v2417
  %v2678 = vunpack.c.l.b16 %v2418
  %v2679 = vunpack.c.l.b16 %v2419
  %v2680 = vunpack.c.l.b16 %v2420
  %v2681 = vunpack.c.l.b16 %v2421
  %v2682 = vunpack.c.l.b16 %v2422
  %v2683 = vunpack.c.l.b16 %v2423
  %v2684 = vunpack.c.l.b16 %v2424
  %v2685 = vunpack.c.l.b16 %v2425
  %v2686 = vunpack.c.l.b16 %v2426
  %v2687 = vunpack.c.l.b16 %v2427
  %v2688 = vunpack.c.l.b16 %v2428
  %v2689 = vunpack.c.l.b16 %v2429
  %v2690 = vunpack.c.l.b16 %v2430
  %v2691 = vunpack.c.l.b16 %v2431
  %v2692 = vunpack.c.l.b16 %v2432
  %v2693 = vunpack.c.l.b16 %v2433
  %v2694 = vunpack.c.l.b16 %v2434
  %v2695 = vunpack.c.l.b16 %v2435
  %v2696 = vunpack.c.l.b16 %v2436
  %v2697 = vunpack.c.l.b16 %v2437
  %v2698 = vunpack.c.l.b16 %v2438
  %v2699 = vunpack.c.l.b16 %v2439
  %v2700 = vunpack.c.l.b16 %v2440
  %v2701 = vunpack.c.l.b16 %v2441
  %v2702 = vunpack.c.l.b16 %v2442
  %v2703 = vunpack.c.l.b16 %v2443
  %v2704 = vunpack.c.l.b16 %v2444
  %v2705 = vunpack.c.l.b16 %v2445
  %v2706 = vunpack.c.l.b16 %v2446
  %v2707 = vunpack.c.l.b16 %v2447
  %v2708 = vunpack.c.l.b16 %v2448
  %v2709 = vunpack.c.l.b16 %v2449
  %v2710 = vunpack.c.l.b16 %v2450
  %vm2711 = vcmask 1041409
  %v2712 = vsel %vm2711, %v2584, %v2583
  %vm2713 = vcmask 1042434
  %v2714 = vsel %vm2713, %v2585, %v2712
  %vm2715 = vcmask 1043459
  %v2716 = vsel %vm2715, %v2586, %v2714
  %vm2717 = vcmask 1044484
  %v2718 = vsel %vm2717, %v2587, %v2716
  %vm2719 = vcmask 1045509
  %v2720 = vsel %vm2719, %v2588, %v2718
  %vm2721 = vcmask 1046534
  %v2722 = vsel %vm2721, %v2589, %v2720
  %vm2723 = vcmask 1047559
  %v2724 = vsel %vm2723, %v2590, %v2722
  %v2725 = vsel %vm2711, %v2592, %v2591
  %v2726 = vsel %vm2713, %v2593, %v2725
  %v2727 = vsel %vm2715, %v2594, %v2726
  %v2728 = vsel %vm2717, %v2595, %v2727
  %v2729 = vsel %vm2719, %v2596, %v2728
  %v2730 = vsel %vm2721, %v2597, %v2729
  %v2731 = vsel %vm2723, %v2598, %v2730
  %v2732 = vsel %vm2711, %v2600, %v2599
  %v2733 = vsel %vm2713, %v2601, %v2732
  %v2734 = vsel %vm2715, %v2602, %v2733
  %v2735 = vsel %vm2717, %v2603, %v2734
  %v2736 = vsel %vm2719, %v2604, %v2735
  %v2737 = vsel %vm2721, %v2605, %v2736
  %v2738 = vsel %vm2723, %v2606, %v2737
  %v2739 = vsel %vm2711, %v2608, %v2607
  %v2740 = vsel %vm2713, %v2609, %v2739
  %v2741 = vsel %vm2715, %v2610, %v2740
  %v2742 = vsel %vm2717, %v2611, %v2741
  %v2743 = vsel %vm2719, %v2612, %v2742
  %v2744 = vsel %vm2721, %v2613, %v2743
  %v2745 = vsel %vm2723, %v2614, %v2744
  %v2746 = vsel %vm2711, %v2616, %v2615
  %v2747 = vsel %vm2713, %v2617, %v2746
  %v2748 = vsel %vm2715, %v2618, %v2747
  %v2749 = vsel %vm2717, %v2619, %v2748
  %v2750 = vsel %vm2719, %v2620, %v2749
  %v2751 = vsel %vm2721, %v2621, %v2750
  %v2752 = vsel %vm2723, %v2622, %v2751
  %v2753 = vsel %vm2711, %v2624, %v2623
  %v2754 = vsel %vm2713, %v2625, %v2753
  %v2755 = vsel %vm2715, %v2626, %v2754
  %v2756 = vsel %vm2717, %v2627, %v2755
  %v2757 = vsel %vm2719, %v2628, %v2756
  %v2758 = vsel %vm2721, %v2629, %v2757
  %v2759 = vsel %vm2723, %v2630, %v2758
  %v2760 = vsel %vm2711, %v2632, %v2631
  %v2761 = vsel %vm2713, %v2633, %v2760
  %v2762 = vsel %vm2715, %v2634, %v2761
  %v2763 = vsel %vm2717, %v2635, %v2762
  %v2764 = vsel %vm2719, %v2636, %v2763
  %v2765 = vsel %vm2721, %v2637, %v2764
  %v2766 = vsel %vm2723, %v2638, %v2765
  %v2767 = vsel %vm2711, %v2640, %v2639
  %v2768 = vsel %vm2713, %v2641, %v2767
  %v2769 = vsel %vm2715, %v2642, %v2768
  %v2770 = vsel %vm2717, %v2643, %v2769
  %v2771 = vsel %vm2719, %v2644, %v2770
  %v2772 = vsel %vm2721, %v2645, %v2771
  %v2773 = vsel %vm2723, %v2646, %v2772
  %v2774 = vsel %vm2711, %v2648, %v2647
  %v2775 = vsel %vm2713, %v2649, %v2774
  %v2776 = vsel %vm2715, %v2650, %v2775
  %v2777 = vsel %vm2717, %v2651, %v2776
  %v2778 = vsel %vm2719, %v2652, %v2777
  %v2779 = vsel %vm2721, %v2653, %v2778
  %v2780 = vsel %vm2723, %v2654, %v2779
  %v2781 = vsel %vm2711, %v2656, %v2655
  %v2782 = vsel %vm2713, %v2657, %v2781
  %v2783 = vsel %vm2715, %v2658, %v2782
  %v2784 = vsel %vm2717, %v2659, %v2783
  %v2785 = vsel %vm2719, %v2660, %v2784
  %v2786 = vsel %vm2721, %v2661, %v2785
  %v2787 = vsel %vm2723, %v2662, %v2786
  %v2788 = vsel %vm2711, %v2664, %v2663
  %v2789 = vsel %vm2713, %v2665, %v2788
  %v2790 = vsel %vm2715, %v2666, %v2789
  %v2791 = vsel %vm2717, %v2667, %v2790
  %v2792 = vsel %vm2719, %v2668, %v2791
  %v2793 = vsel %vm2721, %v2669, %v2792
  %v2794 = vsel %vm2723, %v2670, %v2793
  %v2795 = vsel %vm2711, %v2672, %v2671
  %v2796 = vsel %vm2713, %v2673, %v2795
  %v2797 = vsel %vm2715, %v2674, %v2796
  %v2798 = vsel %vm2717, %v2675, %v2797
  %v2799 = vsel %vm2719, %v2676, %v2798
  %v2800 = vsel %vm2721, %v2677, %v2799
  %v2801 = vsel %vm2723, %v2678, %v2800
  %v2802 = vsel %vm2711, %v2680, %v2679
  %v2803 = vsel %vm2713, %v2681, %v2802
  %v2804 = vsel %vm2715, %v2682, %v2803
  %v2805 = vsel %vm2717, %v2683, %v2804
  %v2806 = vsel %vm2719, %v2684, %v2805
  %v2807 = vsel %vm2721, %v2685, %v2806
  %v2808 = vsel %vm2723, %v2686, %v2807
  %v2809 = vsel %vm2711, %v2688, %v2687
  %v2810 = vsel %vm2713, %v2689, %v2809
  %v2811 = vsel %vm2715, %v2690, %v2810
  %v2812 = vsel %vm2717, %v2691, %v2811
  %v2813 = vsel %vm2719, %v2692, %v2812
  %v2814 = vsel %vm2721, %v2693, %v2813
  %v2815 = vsel %vm2723, %v2694, %v2814
  %v2816 = vsel %vm2711, %v2696, %v2695
  %v2817 = vsel %vm2713, %v2697, %v2816
  %v2818 = vsel %vm2715, %v2698, %v2817
  %v2819 = vsel %vm2717, %v2699, %v2818
  %v2820 = vsel %vm2719, %v2700, %v2819
  %v2821 = vsel %vm2721, %v2701, %v2820
  %v2822 = vsel %vm2723, %v2702, %v2821
  %v2823 = vsel %vm2711, %v2704, %v2703
  %v2824 = vsel %vm2713, %v2705, %v2823
  %v2825 = vsel %vm2715, %v2706, %v2824
  %v2826 = vsel %vm2717, %v2707, %v2825
  %v2827 = vsel %vm2719, %v2708, %v2826
  %v2828 = vsel %vm2721, %v2709, %v2827
  %v2829 = vsel %vm2723, %v2710, %v2828
  %v2830 = vpack.c.b16 %v2731, %v2724
  %v2831 = vpack.c.b16 %v2745, %v2738
  %v2832 = vpack.c.b16 %v2759, %v2752
  %v2833 = vpack.c.b16 %v2773, %v2766
  %v2834 = vpack.c.b16 %v2787, %v2780
  %v2835 = vpack.c.b16 %v2801, %v2794
  %v2836 = vpack.c.b16 %v2815, %v2808
  %v2837 = vpack.c.b16 %v2829, %v2822
  %v2842 = vunpack.c.l.b16 %v2451
  %v2843 = vunpack.c.l.b16 %v2452
  %v2844 = vunpack.c.l.b16 %v2453
  %v2845 = vunpack.c.l.b16 %v2454
  %v2846 = vpack.c.b16 %v2843, %v2842
  %v2847 = vpack.c.b16 %v2845, %v2844
  %v2851 = vsel %vm528, %v2830, 0
  %v2854 = vsel %vm528, %v2831, 0
  %v2857 = vsel %vm528, %v2832, 0
  %v2860 = vsel %vm528, %v2833, 0
  %v2863 = vsel %vm528, %v2834, 0
  %v2866 = vsel %vm528, %v2835, 0
  %v2869 = vsel %vm528, %v2836, 0
  %v2872 = vsel %vm528, %v2837, 0
  %2874 = vmatprep.subr.bf16.mxu0 0
  %2875 = vmatpush1.bf16.msra.mxu0 0
  %2876 = vmatprep.subr.bf16.mxu0 0
  %2877 = vmatpush1.bf16.msra.mxu0 0
  %2878 = vmatprep.subr.bf16.mxu0 0
  %2879 = vmatpush1.bf16.msra.mxu0 0
  %2880 = vmatprep.subr.bf16.mxu0 0
  %2881 = vmatpush1.bf16.msra.mxu0 0
  %2882 = vmatprep.subr.bf16.mxu0 0
  %2883 = vmatpush1.bf16.msra.mxu0 0
  %2884 = vmatprep.subr.bf16.mxu0 0
  %2885 = vmatpush1.bf16.msra.mxu0 0
  %2886 = vmatprep.subr.bf16.mxu0 0
  %2887 = vmatpush1.bf16.msra.mxu0 %v2847
  %2888 = vmatprep.subr.bf16.mxu0 0
  %2889 = vmatpush1.bf16.msra.mxu0 %v2846
  %2890 = vmatprep.subr.bf16.mxu0 0
  %2891 = vmatpush2.bf16.msra.mxu0 0
  %2892 = vmatprep.subr.bf16.mxu0 0
  %2893 = vmatpush2.bf16.msra.mxu0 0
  %2894 = vmatprep.subr.bf16.mxu0 0
  %2895 = vmatpush2.bf16.msra.mxu0 0
  %2896 = vmatprep.subr.bf16.mxu0 0
  %2897 = vmatpush2.bf16.msra.mxu0 0
  %2898 = vmatprep.subr.bf16.mxu0 0
  %2899 = vmatpush2.bf16.msra.mxu0 0
  %2900 = vmatprep.subr.bf16.mxu0 0
  %2901 = vmatpush2.bf16.msra.mxu0 0
  %2902 = vmatprep.subr.bf16.mxu0 0
  %2903 = vmatpush2.bf16.msra.mxu0 0
  %2904 = vmatprep.subr.bf16.mxu0 0
  %2905 = vmatpush2.bf16.msra.mxu0 0
  %2906 = vmatprep.mubr.bf16.mxu0 0
  %2907 = vmatmul.mubr.bf16.gmra.mxu0 %v2851
  %v2908 = vpop.f32.mrf.mxu0
  %v2909 = vadd.f32 0.0, %v2908
  %v2910 = vpop.f32.mrf.mxu0
  %v2911 = vpop.f32.mrf.mxu0
  %v2912 = vadd.f32 0.0, %v2911
  %v2913 = vpop.f32.mrf.mxu0
  %2914 = vmatprep.mubr.bf16.mxu0 0
  %2915 = vmatmul.mubr.bf16.gmra.mxu0 %v2854
  %v2916 = vpop.f32.mrf.mxu0
  %v2917 = vadd.f32 0.0, %v2916
  %v2918 = vpop.f32.mrf.mxu0
  %v2919 = vpop.f32.mrf.mxu0
  %v2920 = vadd.f32 0.0, %v2919
  %v2921 = vpop.f32.mrf.mxu0
  %2922 = vmatprep.mubr.bf16.mxu0 0
  %2923 = vmatmul.mubr.bf16.gmra.mxu0 %v2857
  %v2924 = vpop.f32.mrf.mxu0
  %v2925 = vadd.f32 0.0, %v2924
  %v2926 = vpop.f32.mrf.mxu0
  %v2927 = vpop.f32.mrf.mxu0
  %v2928 = vadd.f32 0.0, %v2927
  %v2929 = vpop.f32.mrf.mxu0
  %2930 = vmatprep.mubr.bf16.mxu0 0
  %2931 = vmatmul.mubr.bf16.gmra.mxu0 %v2860
  %v2932 = vpop.f32.mrf.mxu0
  %v2933 = vadd.f32 0.0, %v2932
  %v2934 = vpop.f32.mrf.mxu0
  %v2935 = vpop.f32.mrf.mxu0
  %v2936 = vadd.f32 0.0, %v2935
  %v2937 = vpop.f32.mrf.mxu0
  %2938 = vmatprep.mubr.bf16.mxu0 0
  %2939 = vmatmul.mubr.bf16.gmra.mxu0 %v2863
  %v2940 = vpop.f32.mrf.mxu0
  %v2941 = vadd.f32 0.0, %v2940
  %v2942 = vpop.f32.mrf.mxu0
  %v2943 = vpop.f32.mrf.mxu0
  %v2944 = vadd.f32 0.0, %v2943
  %v2945 = vpop.f32.mrf.mxu0
  %2946 = vmatprep.mubr.bf16.mxu0 0
  %2947 = vmatmul.mubr.bf16.gmra.mxu0 %v2866
  %v2948 = vpop.f32.mrf.mxu0
  %v2949 = vadd.f32 0.0, %v2948
  %v2950 = vpop.f32.mrf.mxu0
  %v2951 = vpop.f32.mrf.mxu0
  %v2952 = vadd.f32 0.0, %v2951
  %v2953 = vpop.f32.mrf.mxu0
  %2954 = vmatprep.mubr.bf16.mxu0 0
  %2955 = vmatmul.mubr.bf16.gmra.mxu0 %v2869
  %v2956 = vpop.f32.mrf.mxu0
  %v2957 = vadd.f32 0.0, %v2956
  %v2958 = vpop.f32.mrf.mxu0
  %v2959 = vpop.f32.mrf.mxu0
  %v2960 = vadd.f32 0.0, %v2959
  %v2961 = vpop.f32.mrf.mxu0
  %2962 = vmatprep.mubr.bf16.mxu0 0
  %2963 = vmatmul.mubr.bf16.gmra.mxu0 %v2872
  %v2964 = vpop.f32.mrf.mxu0
  %v2965 = vadd.f32 0.0, %v2964
  %v2966 = vpop.f32.mrf.mxu0
  %v2967 = vpop.f32.mrf.mxu0
  %v2968 = vadd.f32 0.0, %v2967
  %v2969 = vpop.f32.mrf.mxu0
  %2970 = vdwg.mxu0
  %v2971 = vmul.f32 %v2909, %v2909
  %v2972 = vmul.f32 %v2912, %v2912
  %v2973 = vmul.f32 %v2917, %v2917
  %v2974 = vmul.f32 %v2920, %v2920
  %v2975 = vmul.f32 %v2925, %v2925
  %v2976 = vmul.f32 %v2928, %v2928
  %v2977 = vmul.f32 %v2933, %v2933
  %v2978 = vmul.f32 %v2936, %v2936
  %v2979 = vmul.f32 %v2941, %v2941
  %v2980 = vmul.f32 %v2944, %v2944
  %v2981 = vmul.f32 %v2949, %v2949
  %v2982 = vmul.f32 %v2952, %v2952
  %v2983 = vmul.f32 %v2957, %v2957
  %v2984 = vmul.f32 %v2960, %v2960
  %v2985 = vmul.f32 %v2965, %v2965
  %v2986 = vmul.f32 %v2968, %v2968
  %v2987 = vsel %vm528, %v2971, 0.0
  %2988 = vadd.xlane.f32.xlu0 %v2987
  %v2989 = vpop.xlane.xlu0 %2988
  %v2990 = vsel %vm528, %v2972, 0.0
  %2991 = vadd.xlane.f32.xlu0 %v2990
  %v2992 = vpop.xlane.xlu0 %2991
  %v2993 = vsel %vm528, %v2973, 0.0
  %2994 = vadd.xlane.f32.xlu0 %v2993
  %v2995 = vpop.xlane.xlu0 %2994
  %v2996 = vsel %vm528, %v2974, 0.0
  %2997 = vadd.xlane.f32.xlu0 %v2996
  %v2998 = vpop.xlane.xlu0 %2997
  %v2999 = vsel %vm528, %v2975, 0.0
  %3000 = vadd.xlane.f32.xlu0 %v2999
  %v3001 = vpop.xlane.xlu0 %3000
  %v3002 = vsel %vm528, %v2976, 0.0
  %3003 = vadd.xlane.f32.xlu0 %v3002
  %v3004 = vpop.xlane.xlu0 %3003
  %v3005 = vsel %vm528, %v2977, 0.0
  %3006 = vadd.xlane.f32.xlu0 %v3005
  %v3007 = vpop.xlane.xlu0 %3006
  %v3008 = vsel %vm528, %v2978, 0.0
  %3009 = vadd.xlane.f32.xlu0 %v3008
  %v3010 = vpop.xlane.xlu0 %3009
  %v3011 = vsel %vm528, %v2979, 0.0
  %3012 = vadd.xlane.f32.xlu0 %v3011
  %v3013 = vpop.xlane.xlu0 %3012
  %v3014 = vsel %vm528, %v2980, 0.0
  %3015 = vadd.xlane.f32.xlu0 %v3014
  %v3016 = vpop.xlane.xlu0 %3015
  %v3017 = vsel %vm528, %v2981, 0.0
  %3018 = vadd.xlane.f32.xlu0 %v3017
  %v3019 = vpop.xlane.xlu0 %3018
  %v3020 = vsel %vm528, %v2982, 0.0
  %3021 = vadd.xlane.f32.xlu0 %v3020
  %v3022 = vpop.xlane.xlu0 %3021
  %v3023 = vsel %vm528, %v2983, 0.0
  %3024 = vadd.xlane.f32.xlu0 %v3023
  %v3025 = vpop.xlane.xlu0 %3024
  %v3026 = vsel %vm528, %v2984, 0.0
  %3027 = vadd.xlane.f32.xlu0 %v3026
  %v3028 = vpop.xlane.xlu0 %3027
  %v3029 = vsel %vm528, %v2985, 0.0
  %3030 = vadd.xlane.f32.xlu0 %v3029
  %v3031 = vpop.xlane.xlu0 %3030
  %v3032 = vsel %vm528, %v2986, 0.0
  %3033 = vadd.xlane.f32.xlu0 %v3032
  %v3034 = vpop.xlane.xlu0 %3033
  %v3035 = vadd.f32 %v2989, 1e-12
  %v3036 = vadd.f32 %v2992, 1e-12
  %v3037 = vadd.f32 %v2995, 1e-12
  %v3038 = vadd.f32 %v2998, 1e-12
  %v3039 = vadd.f32 %v3001, 1e-12
  %v3040 = vadd.f32 %v3004, 1e-12
  %v3041 = vadd.f32 %v3007, 1e-12
  %v3042 = vadd.f32 %v3010, 1e-12
  %v3043 = vadd.f32 %v3013, 1e-12
  %v3044 = vadd.f32 %v3016, 1e-12
  %v3045 = vadd.f32 %v3019, 1e-12
  %v3046 = vadd.f32 %v3022, 1e-12
  %v3047 = vadd.f32 %v3025, 1e-12
  %v3048 = vadd.f32 %v3028, 1e-12
  %v3049 = vadd.f32 %v3031, 1e-12
  %v3050 = vadd.f32 %v3034, 1e-12
  %v3051 = vrsqrt.pop %v3035
  %v3052 = vrsqrt.pop %v3036
  %v3053 = vrsqrt.pop %v3037
  %v3054 = vrsqrt.pop %v3038
  %v3055 = vrsqrt.pop %v3039
  %v3056 = vrsqrt.pop %v3040
  %v3057 = vrsqrt.pop %v3041
  %v3058 = vrsqrt.pop %v3042
  %v3059 = vrsqrt.pop %v3043
  %v3060 = vrsqrt.pop %v3044
  %v3061 = vrsqrt.pop %v3045
  %v3062 = vrsqrt.pop %v3046
  %v3063 = vrsqrt.pop %v3047
  %v3064 = vrsqrt.pop %v3048
  %v3065 = vrsqrt.pop %v3049
  %v3066 = vrsqrt.pop %v3050
  %v3067 = vmul.f32 %v2909, %v3051
  %v3068 = vmul.f32 %v2912, %v3052
  %v3069 = vmul.f32 %v2917, %v3053
  %v3070 = vmul.f32 %v2920, %v3054
  %v3071 = vmul.f32 %v2925, %v3055
  %v3072 = vmul.f32 %v2928, %v3056
  %v3073 = vmul.f32 %v2933, %v3057
  %v3074 = vmul.f32 %v2936, %v3058
  %v3075 = vmul.f32 %v2941, %v3059
  %v3076 = vmul.f32 %v2944, %v3060
  %v3077 = vmul.f32 %v2949, %v3061
  %v3078 = vmul.f32 %v2952, %v3062
  %v3079 = vmul.f32 %v2957, %v3063
  %v3080 = vmul.f32 %v2960, %v3064
  %v3081 = vmul.f32 %v2965, %v3065
  %v3082 = vmul.f32 %v2968, %v3066
  %s3083 = sld [smem:[#allocation2]]
  %v3084 = vstv %s3083
  %v3085 = vmul.f32 %v3067, %v3084
  %v3086 = vmul.f32 %v3068, %v3084
  %v3087 = vmul.f32 %v3069, %v3084
  %v3088 = vmul.f32 %v3070, %v3084
  %v3089 = vmul.f32 %v3071, %v3084
  %v3090 = vmul.f32 %v3072, %v3084
  %v3091 = vmul.f32 %v3073, %v3084
  %v3092 = vmul.f32 %v3074, %v3084
  %v3093 = vmul.f32 %v3075, %v3084
  %v3094 = vmul.f32 %v3076, %v3084
  %v3095 = vmul.f32 %v3077, %v3084
  %v3096 = vmul.f32 %v3078, %v3084
  %v3097 = vmul.f32 %v3079, %v3084
  %v3098 = vmul.f32 %v3080, %v3084
  %v3099 = vmul.f32 %v3081, %v3084
  %v3100 = vmul.f32 %v3082, %v3084
  %3101 = vst.msk [vmem:[%s3] sm:$0xff] %vm528, %v3085
  %3102 = vst.msk [vmem:[%s3 + $0x8] sm:$0xff] %vm528, %v3086
  %3103 = vst.msk [vmem:[%s3 + $0x10] sm:$0xff] %vm528, %v3087
  %3104 = vst.msk [vmem:[%s3 + $0x18] sm:$0xff] %vm528, %v3088
  %3105 = vst.msk [vmem:[%s3 + $0x20] sm:$0xff] %vm528, %v3089
  %3106 = vst.msk [vmem:[%s3 + $0x28] sm:$0xff] %vm528, %v3090
  %3107 = vst.msk [vmem:[%s3 + $0x30] sm:$0xff] %vm528, %v3091
  %3108 = vst.msk [vmem:[%s3 + $0x38] sm:$0xff] %vm528, %v3092
  %3109 = vst.msk [vmem:[%s3 + $0x40] sm:$0xff] %vm528, %v3093
  %3110 = vst.msk [vmem:[%s3 + $0x48] sm:$0xff] %vm528, %v3094
  %3111 = vst.msk [vmem:[%s3 + $0x50] sm:$0xff] %vm528, %v3095
  %3112 = vst.msk [vmem:[%s3 + $0x58] sm:$0xff] %vm528, %v3096
  %3113 = vst.msk [vmem:[%s3 + $0x60] sm:$0xff] %vm528, %v3097
  %3114 = vst.msk [vmem:[%s3 + $0x68] sm:$0xff] %vm528, %v3098
  %3115 = vst.msk [vmem:[%s3 + $0x70] sm:$0xff] %vm528, %v3099
  %3116 = vst.msk [vmem:[%s3 + $0x78] sm:$0xff] %vm528, %v3100
  // Predicated region
  $region14: #{tpu_custom_call.1} parent=0 // pred_check
    _
  $region15: #{tpu_custom_call.1} parent=0 // pred_check_branch
    %3118 = sbr.rel (0) target = $region17
  $region16: #{tpu_custom_call.1} parent=0 // pred_region
    _
  $region17: #{tpu_custom_call.1} parent=0 // pred_fallthru
    _
  // Predicated region
  $region18: #{tpu_custom_call.1} parent=0 // pred_check
    _
  $region19: #{tpu_custom_call.1} parent=0 // pred_check_branch
    %3120 = sbr.rel (0) target = $region21
  $region20: #{tpu_custom_call.1} parent=0 // pred_region
    _
  $region21: #{tpu_custom_call.1} parent=0 // pred_fallthru
    _

</llo_original>
